<compile_context>
chip_gen: v6e
topology: v6e:2x2x1
jax: 0.10.0
libtpu: 0.0.40
codegen_flags: <defaults>
</compile_context>

<pallas_src>
import jax
import jax.numpy as jnp
from jax.experimental import pallas as pl
from jax.experimental.pallas import tpu as pltpu

HIDDEN_NF = 32
EDGE_FEAT_NF = 2          # radial (1) + provided edge_attr (1)
N_LAYERS = 2
NORM_FACTOR = 100.0       # normalization_factor, aggregation_method='sum'
NORM_CONSTANT = 1.0
# tanh=False -> coords_range unused; sin_embedding=None


def _r8(n):
    return (n + 7) // 8 * 8


def _silu(v):
    return v * jax.nn.sigmoid(v)


# ---------------------------------------------------------------------------
# Packed-parameter layout (shared between host-side packing and the kernel).
# Single f32 buffer of width 2H.
# ---------------------------------------------------------------------------
def _pack_layout(hidden_nf=HIDDEN_NF, n_layers=N_LAYERS):
    H = hidden_nf
    offs = {}
    r = 0

    def alloc(name, rows):
        nonlocal r
        offs[name] = r
        r += rows

    for i in range(n_layers):
        alloc(f"eP_{i}", H)        # [H, 2H]  = [eW1_rowpart | eW1_colpart]
        alloc(f"eW2_{i}", H)       # [H, H]
        alloc(f"nW1_{i}", 2 * H)   # [2H, H]  (merged K for concat([h, agg]))
        alloc(f"nW2_{i}", H)       # [H, H]
    alloc("cP", H)                 # [H, 2H]
    alloc("cW2", H)                # [H, H]

    vec_names = []
    for i in range(n_layers):
        vec_names += [f"e_wr_{i}", f"e_we_{i}", f"eb1_{i}", f"eb2_{i}",
                      f"att_w_{i}", f"att_b_{i}", f"nb1_{i}", f"nb2_{i}"]
    vec_names += ["c_wr", "c_we", "cb1", "cb2", "cw3"]
    for nm in vec_names:
        alloc(nm, 1)               # 1 row, lanes 0:H used
    return offs, r


def pack_params(params, hidden_nf=HIDDEN_NF, n_layers=N_LAYERS):
    """Pack the 25 small parameter arrays into one contiguous [R, 2H] buffer."""
    H = hidden_nf
    offs, R = _pack_layout(H, n_layers)
    P = jnp.zeros((R, 2 * H), jnp.float32)

    def setb(name, mat):
        nonlocal P
        mat = jnp.asarray(mat, jnp.float32)
        if mat.ndim == 1:
            mat = mat.reshape(1, -1)
        r0 = offs[name]
        P = P.at[r0:r0 + mat.shape[0], :mat.shape[1]].set(mat)

    for i in range(n_layers):
        (eW1, eb1, eW2, eb2, attW, attb, nW1, nb1, nW2, nb2) = \
            params[10 * i:10 * (i + 1)]
        setb(f"eP_{i}", jnp.concatenate([eW1[:H, :], eW1[H:2 * H, :]], axis=1))
        setb(f"e_wr_{i}", eW1[2 * H:2 * H + 1, :])       # radial row
        setb(f"e_we_{i}", eW1[2 * H + 1:2 * H + 2, :])   # provided edge_attr row
        setb(f"eb1_{i}", jnp.reshape(eb1, (1, -1)))
        setb(f"eW2_{i}", eW2)
        setb(f"eb2_{i}", jnp.reshape(eb2, (1, -1)))
        setb(f"att_w_{i}", attW.T)                       # [1, H]
        setb(f"att_b_{i}", jnp.reshape(attb, (1, -1)))   # scalar in column 0
        setb(f"nW1_{i}", nW1)
        setb(f"nb1_{i}", jnp.reshape(nb1, (1, -1)))
        setb(f"nW2_{i}", nW2)
        setb(f"nb2_{i}", jnp.reshape(nb2, (1, -1)))
    cW1, cb1, cW2, cb2, cW3 = params[10 * n_layers:]
    setb("cP", jnp.concatenate([cW1[:H, :], cW1[H:2 * H, :]], axis=1))
    setb("c_wr", cW1[2 * H:2 * H + 1, :])
    setb("c_we", cW1[2 * H + 1:2 * H + 2, :])
    setb("cb1", jnp.reshape(cb1, (1, -1)))
    setb("cW2", cW2)
    setb("cb2", jnp.reshape(cb2, (1, -1)))
    setb("cw3", cW3.T)                                   # [1, H]
    return P


# ---------------------------------------------------------------------------
# Kernel
# ---------------------------------------------------------------------------
def _equivariant_block_kernel(h_ref, x_ref, rc_ref, rt_ref, ea_ref, nmask_ref,
                              emask_ref, p_ref, h_out_ref, x_out_ref):
    h = h_ref[...]                        # [N, H]
    x = x_ref[...]                        # [N, 3]
    rc = rc_ref[...]                      # [E, 2] int32 (col0 = row, col1 = col)
    rt = rt_ref[...]                      # [1, E] int32 (row, for scatter)
    ea = ea_ref[...]                      # [E, 1]
    node_mask = nmask_ref[...]            # [N, 1]
    edge_mask = emask_ref[...]            # [E, 1]
    P = p_ref[...]                        # [R, 2H] packed parameters

    N, H = h.shape
    E = rc.shape[0]
    H2 = 2 * H

    offs, _ = _pack_layout(H, N_LAYERS)   # static python dict

    def blk(name, rows, cols):
        o = offs[name]
        return P[o:o + rows, :cols]

    def vrow(name):
        o = offs[name]
        return P[o:o + 1, :H]             # [1, H]

    def dot(a, b):
        return jnp.dot(a, b, preferred_element_type=jnp.float32)

    inv_norm = 1.0 / NORM_FACTOR

    re = rc[:, 0:1]                       # [E, 1]
    ce = rc[:, 1:2]                       # [E, 1]

    # --- gather one-hot [E, 2N]: lane n hits row[e], lane N+n hits col[e] ----
    iota_g = jax.lax.broadcasted_iota(jnp.int32, (E, 2 * N), 1)
    onehot_g = jnp.logical_or(iota_g == re, iota_g == ce + N).astype(jnp.float32)
    # --- scatter one-hot (pre-transposed) [N, E]: no XLU transpose needed ----
    iota_s = jax.lax.broadcasted_iota(jnp.int32, (N, E), 0)
    onehot_s = (iota_s == rt).astype(jnp.float32)

    # hoisted broadcasts (JAX does not CSE broadcast_in_dim)
    node_mask_h = jnp.broadcast_to(node_mask, (N, H))
    x_stack = jnp.concatenate([x, -x], axis=0)          # [2N, 3] -> +x / -x

    def node_proj_stacked(hh, name):
        # hp = hh @ [W_row | W_col]  -> [N, 2H]; stack to [2N, H]
        hp = dot(hh, blk(name, H, H2))
        return jnp.concatenate([hp[:, :H], hp[:, H:]], axis=0)

    radial = None
    coord_diff = None

    # --- GCL layers -----------------------------------------------------------
    for i in range(N_LAYERS):
        stacked = node_proj_stacked(h, f"eP_{i}")       # [2N, H]
        if i == 0:
            # fuse coord gather into the first h gather (3 extra columns)
            stacked = jnp.concatenate([stacked, x_stack], axis=1)   # [2N, H+3]
            g = dot(onehot_g, stacked)                              # [E, H+3]
            diff = g[:, H:H + 3]                                    # x[row]-x[col]
            radial = jnp.sum(diff * diff, axis=1, keepdims=True)    # [E, 1]
            norm = jnp.sqrt(radial + 1e-8)
            coord_diff = diff / (norm + NORM_CONSTANT)              # exact divide
            g = g[:, :H]
        else:
            g = dot(onehot_g, stacked)                              # [E, H]

        m = _silu(g + radial * vrow(f"e_wr_{i}") + ea * vrow(f"e_we_{i}")
                  + vrow(f"eb1_{i}"))
        mij = _silu(dot(m, blk(f"eW2_{i}", H, H)) + vrow(f"eb2_{i}"))   # [E, H]

        # attention: 1-column matmul -> VPU broadcast-mul + XLU lane reduce
        att = jax.nn.sigmoid(
            jnp.sum(mij * vrow(f"att_w_{i}"), axis=-1, keepdims=True)
            + vrow(f"att_b_{i}")[:, 0:1])                           # [E, 1]
        edge_feat = mij * (att * edge_mask)                         # [E, H]

        agg = dot(onehot_s, edge_feat) * inv_norm                   # [N, H]

        # node MLP: merged K = 2H matmul on concat([h, agg])
        nin = jnp.concatenate([h, agg], axis=1)                     # [N, 2H]
        nm = _silu(dot(nin, blk(f"nW1_{i}", H2, H)) + vrow(f"nb1_{i}"))
        h = h + dot(nm, blk(f"nW2_{i}", H, H)) + vrow(f"nb2_{i}")
        h = h * node_mask_h

    # --- EquivariantUpdate (gcl_equiv) ----------------------------------------
    stacked_c = node_proj_stacked(h, "cP")                          # [2N, H]
    prec = (dot(onehot_g, stacked_c) + radial * vrow("c_wr")
            + ea * vrow("c_we") + vrow("cb1"))
    c1 = _silu(prec)
    c2 = _silu(dot(c1, blk("cW2", H, H)) + vrow("cb2"))
    # final Linear(hidden, 1, bias=False): lane reduce instead of 1-col matmul
    phi = jnp.sum(c2 * vrow("cw3"), axis=-1, keepdims=True)         # [E, 1]
    trans = coord_diff * (phi * edge_mask)                          # [E, 3]
    agg_x = dot(onehot_s, trans) * inv_norm                         # [N, 3]
    x_new = (x + agg_x) * node_mask

    # Reference applies node_mask inside GCL *and* again in EquivariantBlock.
    h_out_ref[...] = h * node_mask_h
    x_out_ref[...] = x_new


# ---------------------------------------------------------------------------
# Wrapper
# ---------------------------------------------------------------------------
def equivariant_block(h, x, row, col, edge_attr, node_mask, edge_mask, p_pack):
    f32 = jnp.float32
    N, H = h.shape
    E = row.shape[0]
    Np = _r8(max(N, 8))
    Ep = _r8(max(E, 8))

    # pad nodes/edges to sublane multiples; padded edges get edge_mask = 0 and
    # endpoints 0, so they contribute nothing to the segment sums.
    h_p = jnp.zeros((Np, H), f32).at[:N, :].set(h.astype(f32))
    x_p = jnp.zeros((Np, 3), f32).at[:N, :].set(x.astype(f32))
    nm_p = jnp.zeros((Np, 1), f32).at[:N, :].set(
        node_mask.astype(f32).reshape(N, 1))
    row_i = jnp.zeros((Ep,), jnp.int32).at[:E].set(row.astype(jnp.int32))
    col_i = jnp.zeros((Ep,), jnp.int32).at[:E].set(col.astype(jnp.int32))
    rc = jnp.stack([row_i, col_i], axis=1)           # [Ep, 2]
    rt = row_i.reshape(1, Ep)                        # [1, Ep]
    ea_p = jnp.zeros((Ep, 1), f32).at[:E, :].set(
        edge_attr.astype(f32).reshape(E, 1))
    em_p = jnp.zeros((Ep, 1), f32).at[:E, :].set(
        edge_mask.astype(f32).reshape(E, 1))

    vmem = pl.BlockSpec(memory_space=pltpu.MemorySpace.VMEM)
    out_shape = (jax.ShapeDtypeStruct((Np, H), f32),
                 jax.ShapeDtypeStruct((Np, 3), f32))
    fn = pl.pallas_call(
        _equivariant_block_kernel,
        out_shape=out_shape,
        in_specs=[vmem] * 8,
        out_specs=(vmem, vmem),
        input_output_aliases={0: 0, 1: 1},           # h, x updated in place
        compiler_params=pltpu.CompilerParams(
            # <= ~56 MiB keeps v7x's 64 MiB physical VMEM safe; well above
            # v5e's 16 MiB scoped default so larger resident blocks are allowed.
            vmem_limit_bytes=48 * 1024 * 1024),
    )
    h_out, x_out = fn(h_p, x_p, rc, rt, ea_p, nm_p, em_p, p_pack)
    return h_out[:N], x_out[:N]


# ---------------------------------------------------------------------------
# Parameter init (matches torch nn.Linear defaults; weights stored [in, out])
# ---------------------------------------------------------------------------
def _linear_init(key, fan_in, fan_out):
    k_w, k_b = jax.random.split(key)
    bound = 1.0 / (fan_in ** 0.5)
    w = jax.random.uniform(k_w, (fan_in, fan_out), jnp.float32, -bound, bound)
    b = jax.random.uniform(k_b, (1, fan_out), jnp.float32, -bound, bound)
    return w, b


def init_params(key, hidden_nf=HIDDEN_NF, edge_feat_nf=EDGE_FEAT_NF,
                n_layers=N_LAYERS):
    in_edge = 2 * hidden_nf + edge_feat_nf
    params = []
    keys = jax.random.split(key, n_layers * 5 + 3)
    kidx = 0
    for _ in range(n_layers):
        eW1, eb1 = _linear_init(keys[kidx], in_edge, hidden_nf); kidx += 1
        eW2, eb2 = _linear_init(keys[kidx], hidden_nf, hidden_nf); kidx += 1
        attW, attb = _linear_init(keys[kidx], hidden_nf, 1); kidx += 1
        nW1, nb1 = _linear_init(keys[kidx], 2 * hidden_nf, hidden_nf); kidx += 1
        nW2, nb2 = _linear_init(keys[kidx], hidden_nf, hidden_nf); kidx += 1
        params += [eW1, eb1, eW2, eb2, attW, attb, nW1, nb1, nW2, nb2]
    # coord_mlp of EquivariantUpdate
    cW1, cb1 = _linear_init(keys[kidx], in_edge, hidden_nf); kidx += 1
    cW2, cb2 = _linear_init(keys[kidx], hidden_nf, hidden_nf); kidx += 1
    # final Linear(hidden, 1, bias=False), xavier_uniform gain=0.001
    gain = 0.001
    bound = gain * (6.0 / (hidden_nf + 1)) ** 0.5
    cW3 = jax.random.uniform(keys[kidx], (hidden_nf, 1), jnp.float32,
                             -bound, bound)
    params += [cW1, cb1, cW2, cb2, cW3]
    return params


if __name__ == "__main__":
    key = jax.random.PRNGKey(0)
    N, H = 8, HIDDEN_NF

    # fully connected edge set without self-loops -> E = N*(N-1) = 56
    idx = jnp.arange(N, dtype=jnp.int32)
    rows_full = jnp.repeat(idx, N)
    cols_full = jnp.tile(idx, N)
    keep = rows_full != cols_full
    row = rows_full[keep]
    col = cols_full[keep]
    E = int(row.shape[0])

    k_h, k_x, k_e, k_p = jax.random.split(key, 4)
    h = jax.random.normal(k_h, (N, H), jnp.float32)
    x = jax.random.normal(k_x, (N, 3), jnp.float32)
    edge_attr = jax.random.normal(k_e, (E, 1), jnp.float32)
    node_mask = jnp.ones((N, 1), jnp.float32)
    edge_mask = jnp.ones((E, 1), jnp.float32)

    params = init_params(k_p)
    p_pack = pack_params(params)

    eq_block = jax.jit(equivariant_block)
    h_out, x_out = eq_block(h, x, row, col, edge_attr,
                            node_mask, edge_mask, p_pack)
    jax.block_until_ready((h_out, x_out))

    assert h_out.shape == (N, H) and x_out.shape == (N, 3)
    assert bool(jnp.all(jnp.isfinite(h_out))) and bool(jnp.all(jnp.isfinite(x_out)))
    print("KERNEL_OK")
</pallas_src>

<mosaic_0001>
module attributes {stable_mosaic.version = 11 : i64} {
  func.func @_equivariant_block_kernel(%arg0: memref<8x32xf32, #tpu.memory_space<vmem>>, %arg1: memref<8x3xf32, #tpu.memory_space<vmem>>, %arg2: memref<56x2xi32, #tpu.memory_space<vmem>>, %arg3: memref<1x56xi32, #tpu.memory_space<vmem>>, %arg4: memref<56x1xf32, #tpu.memory_space<vmem>>, %arg5: memref<8x1xf32, #tpu.memory_space<vmem>>, %arg6: memref<56x1xf32, #tpu.memory_space<vmem>>, %arg7: memref<405x64xf32, #tpu.memory_space<vmem>>, %arg8: memref<8x32xf32, #tpu.memory_space<vmem>>, %arg9: memref<8x3xf32, #tpu.memory_space<vmem>>) attributes {dimension_semantics = [], scalar_prefetch = 0 : i64, scratch_operands = 0 : i64, tpu.core_type = #tpu.core_type<tc>} {
    %c0 = arith.constant 0 : index
    %c0_0 = arith.constant 0 : index
    %0 = vector.load %arg0[%c0, %c0_0] : memref<8x32xf32, #tpu.memory_space<vmem>>, vector<8x32xf32>
    %c0_1 = arith.constant 0 : index
    %c0_2 = arith.constant 0 : index
    %1 = vector.load %arg1[%c0_1, %c0_2] : memref<8x3xf32, #tpu.memory_space<vmem>>, vector<8x3xf32>
    %c0_3 = arith.constant 0 : index
    %c0_4 = arith.constant 0 : index
    %2 = vector.load %arg2[%c0_3, %c0_4] : memref<56x2xi32, #tpu.memory_space<vmem>>, vector<56x2xi32>
    %c0_5 = arith.constant 0 : index
    %c0_6 = arith.constant 0 : index
    %3 = vector.load %arg3[%c0_5, %c0_6] : memref<1x56xi32, #tpu.memory_space<vmem>>, vector<1x56xi32>
    %c0_7 = arith.constant 0 : index
    %c0_8 = arith.constant 0 : index
    %4 = vector.load %arg4[%c0_7, %c0_8] : memref<56x1xf32, #tpu.memory_space<vmem>>, vector<56x1xf32>
    %c0_9 = arith.constant 0 : index
    %c0_10 = arith.constant 0 : index
    %5 = vector.load %arg5[%c0_9, %c0_10] : memref<8x1xf32, #tpu.memory_space<vmem>>, vector<8x1xf32>
    %c0_11 = arith.constant 0 : index
    %c0_12 = arith.constant 0 : index
    %6 = vector.load %arg6[%c0_11, %c0_12] : memref<56x1xf32, #tpu.memory_space<vmem>>, vector<56x1xf32>
    %c0_13 = arith.constant 0 : index
    %c0_14 = arith.constant 0 : index
    %7 = vector.load %arg7[%c0_13, %c0_14] : memref<405x64xf32, #tpu.memory_space<vmem>>, vector<405x64xf32>
    %8 = vector.extract_strided_slice %2 {offsets = [0, 0], sizes = [56, 1], strides = [1, 1]} : vector<56x2xi32> to vector<56x1xi32>
    %9 = vector.extract_strided_slice %2 {offsets = [0, 1], sizes = [56, 1], strides = [1, 1]} : vector<56x2xi32> to vector<56x1xi32>
    %10 = tpu.iota {dimensions = array<i32: 1>} : vector<56x16xi32>
    %11 = vector.broadcast %8 : vector<56x1xi32> to vector<56x16xi32>
    %12 = arith.cmpi eq, %10, %11 : vector<56x16xi32>
    %c8_i32 = arith.constant 8 : i32
    %13 = vector.broadcast %c8_i32 : i32 to vector<56x1xi32>
    %14 = arith.addi %9, %13 : vector<56x1xi32>
    %15 = vector.broadcast %14 : vector<56x1xi32> to vector<56x16xi32>
    %16 = arith.cmpi eq, %10, %15 : vector<56x16xi32>
    %17 = arith.ori %12, %16 : vector<56x16xi1>
    %18 = arith.extui %17 : vector<56x16xi1> to vector<56x16xi32>
    %19 = arith.sitofp %18 : vector<56x16xi32> to vector<56x16xf32>
    %20 = tpu.iota {dimensions = array<i32: 0>} : vector<8x56xi32>
    %21 = vector.broadcast %3 : vector<1x56xi32> to vector<8x56xi32>
    %22 = arith.cmpi eq, %20, %21 : vector<8x56xi32>
    %23 = arith.extui %22 : vector<8x56xi1> to vector<8x56xi32>
    %24 = arith.sitofp %23 : vector<8x56xi32> to vector<8x56xf32>
    %25 = vector.shape_cast %5 : vector<8x1xf32> to vector<8x1xf32>
    %26 = vector.broadcast %25 : vector<8x1xf32> to vector<8x32xf32>
    %cst = arith.constant 0.000000e+00 : f32
    %27 = vector.broadcast %cst : f32 to vector<8x3xf32>
    %28 = arith.subf %27, %1 : vector<8x3xf32>
    %29 = tpu.concatenate %1, %28 in 0 : vector<8x3xf32>, vector<8x3xf32> -> vector<16x3xf32>
    %30 = vector.extract_strided_slice %7 {offsets = [0, 0], sizes = [32, 64], strides = [1, 1]} : vector<405x64xf32> to vector<32x64xf32>
    %cst_15 = arith.constant dense<0.000000e+00> : vector<8x64xf32>
    %31 = tpu.matmul %0, %30, %cst_15 {dimension_numbers = #tpu.dot_dimension_numbers<[1], [0], [0], [1], [0, 0, 1, 1], [], []>} : vector<8x32xf32>, vector<32x64xf32>, vector<8x64xf32> -> vector<8x64xf32>
    %32 = vector.extract_strided_slice %31 {offsets = [0, 0], sizes = [8, 32], strides = [1, 1]} : vector<8x64xf32> to vector<8x32xf32>
    %33 = vector.extract_strided_slice %31 {offsets = [0, 32], sizes = [8, 32], strides = [1, 1]} : vector<8x64xf32> to vector<8x32xf32>
    %34 = tpu.concatenate %32, %33 in 0 : vector<8x32xf32>, vector<8x32xf32> -> vector<16x32xf32>
    %35 = tpu.concatenate %34, %29 in 1 : vector<16x32xf32>, vector<16x3xf32> -> vector<16x35xf32>
    %cst_16 = arith.constant dense<0.000000e+00> : vector<56x35xf32>
    %36 = tpu.matmul %19, %35, %cst_16 {dimension_numbers = #tpu.dot_dimension_numbers<[1], [0], [0], [1], [0, 0, 1, 1], [], []>} : vector<56x16xf32>, vector<16x35xf32>, vector<56x35xf32> -> vector<56x35xf32>
    %37 = vector.extract_strided_slice %36 {offsets = [0, 32], sizes = [56, 3], strides = [1, 1]} : vector<56x35xf32> to vector<56x3xf32>
    %38 = arith.mulf %37, %37 : vector<56x3xf32>
    %cst_17 = arith.constant dense<0.000000e+00> : vector<56xf32>
    %39 = vector.multi_reduction <add>, %38, %cst_17 [1] : vector<56x3xf32> to vector<56xf32>
    %40 = vector.shape_cast %39 : vector<56xf32> to vector<56x1xf32>
    %cst_18 = arith.constant 9.99999993E-9 : f32
    %41 = vector.broadcast %cst_18 : f32 to vector<56x1xf32>
    %42 = arith.addf %40, %41 : vector<56x1xf32>
    %43 = math.sqrt %42 : vector<56x1xf32>
    %cst_19 = arith.constant 1.000000e+00 : f32
    %44 = vector.broadcast %cst_19 : f32 to vector<56x1xf32>
    %45 = arith.addf %43, %44 : vector<56x1xf32>
    %46 = vector.broadcast %45 : vector<56x1xf32> to vector<56x3xf32>
    %47 = arith.divf %37, %46 : vector<56x3xf32>
    %48 = vector.extract_strided_slice %36 {offsets = [0, 0], sizes = [56, 32], strides = [1, 1]} : vector<56x35xf32> to vector<56x32xf32>
    %49 = vector.extract_strided_slice %7 {offsets = [384, 0], sizes = [1, 32], strides = [1, 1]} : vector<405x64xf32> to vector<1x32xf32>
    %50 = vector.broadcast %40 : vector<56x1xf32> to vector<56x32xf32>
    %51 = vector.broadcast %49 : vector<1x32xf32> to vector<56x32xf32>
    %52 = arith.mulf %50, %51 : vector<56x32xf32>
    %53 = arith.addf %48, %52 : vector<56x32xf32>
    %54 = vector.extract_strided_slice %7 {offsets = [385, 0], sizes = [1, 32], strides = [1, 1]} : vector<405x64xf32> to vector<1x32xf32>
    %55 = vector.broadcast %4 : vector<56x1xf32> to vector<56x32xf32>
    %56 = vector.broadcast %54 : vector<1x32xf32> to vector<56x32xf32>
    %57 = arith.mulf %55, %56 : vector<56x32xf32>
    %58 = arith.addf %53, %57 : vector<56x32xf32>
    %59 = vector.extract_strided_slice %7 {offsets = [386, 0], sizes = [1, 32], strides = [1, 1]} : vector<405x64xf32> to vector<1x32xf32>
    %60 = vector.broadcast %59 : vector<1x32xf32> to vector<56x32xf32>
    %61 = arith.addf %58, %60 : vector<56x32xf32>
    %62 = arith.negf %61 : vector<56x32xf32>
    %63 = math.exp %62 : vector<56x32xf32>
    %cst_20 = arith.constant 1.000000e+00 : f32
    %64 = vector.broadcast %cst_20 : f32 to vector<56x32xf32>
    %65 = arith.addf %64, %63 : vector<56x32xf32>
    %66 = arith.divf %64, %65 : vector<56x32xf32>
    %67 = arith.mulf %61, %66 : vector<56x32xf32>
    %68 = vector.extract_strided_slice %7 {offsets = [32, 0], sizes = [32, 32], strides = [1, 1]} : vector<405x64xf32> to vector<32x32xf32>
    %cst_21 = arith.constant dense<0.000000e+00> : vector<56x32xf32>
    %69 = tpu.matmul %67, %68, %cst_21 {dimension_numbers = #tpu.dot_dimension_numbers<[1], [0], [0], [1], [0, 0, 1, 1], [], []>} : vector<56x32xf32>, vector<32x32xf32>, vector<56x32xf32> -> vector<56x32xf32>
    %70 = vector.extract_strided_slice %7 {offsets = [387, 0], sizes = [1, 32], strides = [1, 1]} : vector<405x64xf32> to vector<1x32xf32>
    %71 = vector.broadcast %70 : vector<1x32xf32> to vector<56x32xf32>
    %72 = arith.addf %69, %71 : vector<56x32xf32>
    %73 = arith.negf %72 : vector<56x32xf32>
    %74 = math.exp %73 : vector<56x32xf32>
    %cst_22 = arith.constant 1.000000e+00 : f32
    %75 = vector.broadcast %cst_22 : f32 to vector<56x32xf32>
    %76 = arith.addf %75, %74 : vector<56x32xf32>
    %77 = arith.divf %75, %76 : vector<56x32xf32>
    %78 = arith.mulf %72, %77 : vector<56x32xf32>
    %79 = vector.extract_strided_slice %7 {offsets = [388, 0], sizes = [1, 32], strides = [1, 1]} : vector<405x64xf32> to vector<1x32xf32>
    %80 = vector.broadcast %79 : vector<1x32xf32> to vector<56x32xf32>
    %81 = arith.mulf %78, %80 : vector<56x32xf32>
    %cst_23 = arith.constant dense<0.000000e+00> : vector<56xf32>
    %82 = vector.multi_reduction <add>, %81, %cst_23 [1] : vector<56x32xf32> to vector<56xf32>
    %83 = vector.shape_cast %82 : vector<56xf32> to vector<56x1xf32>
    %84 = vector.extract_strided_slice %7 {offsets = [389, 0], sizes = [1, 32], strides = [1, 1]} : vector<405x64xf32> to vector<1x32xf32>
    %85 = vector.extract_strided_slice %84 {offsets = [0, 0], sizes = [1, 1], strides = [1, 1]} : vector<1x32xf32> to vector<1x1xf32>
    %86 = vector.broadcast %85 : vector<1x1xf32> to vector<56x1xf32>
    %87 = arith.addf %83, %86 : vector<56x1xf32>
    %88 = arith.negf %87 : vector<56x1xf32>
    %89 = math.exp %88 : vector<56x1xf32>
    %cst_24 = arith.constant 1.000000e+00 : f32
    %90 = vector.broadcast %cst_24 : f32 to vector<56x1xf32>
    %91 = arith.addf %90, %89 : vector<56x1xf32>
    %92 = arith.divf %90, %91 : vector<56x1xf32>
    %93 = arith.mulf %92, %6 : vector<56x1xf32>
    %94 = vector.broadcast %93 : vector<56x1xf32> to vector<56x32xf32>
    %95 = arith.mulf %78, %94 : vector<56x32xf32>
    %cst_25 = arith.constant dense<0.000000e+00> : vector<8x32xf32>
    %96 = tpu.matmul %24, %95, %cst_25 {dimension_numbers = #tpu.dot_dimension_numbers<[1], [0], [0], [1], [0, 0, 1, 1], [], []>} : vector<8x56xf32>, vector<56x32xf32>, vector<8x32xf32> -> vector<8x32xf32>
    %cst_26 = arith.constant 0.00999999977 : f32
    %97 = vector.broadcast %cst_26 : f32 to vector<8x32xf32>
    %98 = arith.mulf %96, %97 : vector<8x32xf32>
    %99 = tpu.concatenate %0, %98 in 1 : vector<8x32xf32>, vector<8x32xf32> -> vector<8x64xf32>
    %100 = vector.extract_strided_slice %7 {offsets = [64, 0], sizes = [64, 32], strides = [1, 1]} : vector<405x64xf32> to vector<64x32xf32>
    %cst_27 = arith.constant dense<0.000000e+00> : vector<8x32xf32>
    %101 = tpu.matmul %99, %100, %cst_27 {dimension_numbers = #tpu.dot_dimension_numbers<[1], [0], [0], [1], [0, 0, 1, 1], [], []>} : vector<8x64xf32>, vector<64x32xf32>, vector<8x32xf32> -> vector<8x32xf32>
    %102 = vector.extract_strided_slice %7 {offsets = [390, 0], sizes = [1, 32], strides = [1, 1]} : vector<405x64xf32> to vector<1x32xf32>
    %103 = vector.broadcast %102 : vector<1x32xf32> to vector<8x32xf32>
    %104 = arith.addf %101, %103 : vector<8x32xf32>
    %105 = arith.negf %104 : vector<8x32xf32>
    %106 = math.exp %105 : vector<8x32xf32>
    %cst_28 = arith.constant 1.000000e+00 : f32
    %107 = vector.broadcast %cst_28 : f32 to vector<8x32xf32>
    %108 = arith.addf %107, %106 : vector<8x32xf32>
    %109 = arith.divf %107, %108 : vector<8x32xf32>
    %110 = arith.mulf %104, %109 : vector<8x32xf32>
    %111 = vector.extract_strided_slice %7 {offsets = [128, 0], sizes = [32, 32], strides = [1, 1]} : vector<405x64xf32> to vector<32x32xf32>
    %cst_29 = arith.constant dense<0.000000e+00> : vector<8x32xf32>
    %112 = tpu.matmul %110, %111, %cst_29 {dimension_numbers = #tpu.dot_dimension_numbers<[1], [0], [0], [1], [0, 0, 1, 1], [], []>} : vector<8x32xf32>, vector<32x32xf32>, vector<8x32xf32> -> vector<8x32xf32>
    %113 = arith.addf %0, %112 : vector<8x32xf32>
    %114 = vector.extract_strided_slice %7 {offsets = [391, 0], sizes = [1, 32], strides = [1, 1]} : vector<405x64xf32> to vector<1x32xf32>
    %115 = vector.broadcast %114 : vector<1x32xf32> to vector<8x32xf32>
    %116 = arith.addf %113, %115 : vector<8x32xf32>
    %117 = arith.mulf %116, %26 : vector<8x32xf32>
    %118 = vector.extract_strided_slice %7 {offsets = [160, 0], sizes = [32, 64], strides = [1, 1]} : vector<405x64xf32> to vector<32x64xf32>
    %cst_30 = arith.constant dense<0.000000e+00> : vector<8x64xf32>
    %119 = tpu.matmul %117, %118, %cst_30 {dimension_numbers = #tpu.dot_dimension_numbers<[1], [0], [0], [1], [0, 0, 1, 1], [], []>} : vector<8x32xf32>, vector<32x64xf32>, vector<8x64xf32> -> vector<8x64xf32>
    %120 = vector.extract_strided_slice %119 {offsets = [0, 0], sizes = [8, 32], strides = [1, 1]} : vector<8x64xf32> to vector<8x32xf32>
    %121 = vector.extract_strided_slice %119 {offsets = [0, 32], sizes = [8, 32], strides = [1, 1]} : vector<8x64xf32> to vector<8x32xf32>
    %122 = tpu.concatenate %120, %121 in 0 : vector<8x32xf32>, vector<8x32xf32> -> vector<16x32xf32>
    %cst_31 = arith.constant dense<0.000000e+00> : vector<56x32xf32>
    %123 = tpu.matmul %19, %122, %cst_31 {dimension_numbers = #tpu.dot_dimension_numbers<[1], [0], [0], [1], [0, 0, 1, 1], [], []>} : vector<56x16xf32>, vector<16x32xf32>, vector<56x32xf32> -> vector<56x32xf32>
    %124 = vector.extract_strided_slice %7 {offsets = [392, 0], sizes = [1, 32], strides = [1, 1]} : vector<405x64xf32> to vector<1x32xf32>
    %125 = vector.broadcast %40 : vector<56x1xf32> to vector<56x32xf32>
    %126 = vector.broadcast %124 : vector<1x32xf32> to vector<56x32xf32>
    %127 = arith.mulf %125, %126 : vector<56x32xf32>
    %128 = arith.addf %123, %127 : vector<56x32xf32>
    %129 = vector.extract_strided_slice %7 {offsets = [393, 0], sizes = [1, 32], strides = [1, 1]} : vector<405x64xf32> to vector<1x32xf32>
    %130 = vector.broadcast %4 : vector<56x1xf32> to vector<56x32xf32>
    %131 = vector.broadcast %129 : vector<1x32xf32> to vector<56x32xf32>
    %132 = arith.mulf %130, %131 : vector<56x32xf32>
    %133 = arith.addf %128, %132 : vector<56x32xf32>
    %134 = vector.extract_strided_slice %7 {offsets = [394, 0], sizes = [1, 32], strides = [1, 1]} : vector<405x64xf32> to vector<1x32xf32>
    %135 = vector.broadcast %134 : vector<1x32xf32> to vector<56x32xf32>
    %136 = arith.addf %133, %135 : vector<56x32xf32>
    %137 = arith.negf %136 : vector<56x32xf32>
    %138 = math.exp %137 : vector<56x32xf32>
    %cst_32 = arith.constant 1.000000e+00 : f32
    %139 = vector.broadcast %cst_32 : f32 to vector<56x32xf32>
    %140 = arith.addf %139, %138 : vector<56x32xf32>
    %141 = arith.divf %139, %140 : vector<56x32xf32>
    %142 = arith.mulf %136, %141 : vector<56x32xf32>
    %143 = vector.extract_strided_slice %7 {offsets = [192, 0], sizes = [32, 32], strides = [1, 1]} : vector<405x64xf32> to vector<32x32xf32>
    %cst_33 = arith.constant dense<0.000000e+00> : vector<56x32xf32>
    %144 = tpu.matmul %142, %143, %cst_33 {dimension_numbers = #tpu.dot_dimension_numbers<[1], [0], [0], [1], [0, 0, 1, 1], [], []>} : vector<56x32xf32>, vector<32x32xf32>, vector<56x32xf32> -> vector<56x32xf32>
    %145 = vector.extract_strided_slice %7 {offsets = [395, 0], sizes = [1, 32], strides = [1, 1]} : vector<405x64xf32> to vector<1x32xf32>
    %146 = vector.broadcast %145 : vector<1x32xf32> to vector<56x32xf32>
    %147 = arith.addf %144, %146 : vector<56x32xf32>
    %148 = arith.negf %147 : vector<56x32xf32>
    %149 = math.exp %148 : vector<56x32xf32>
    %cst_34 = arith.constant 1.000000e+00 : f32
    %150 = vector.broadcast %cst_34 : f32 to vector<56x32xf32>
    %151 = arith.addf %150, %149 : vector<56x32xf32>
    %152 = arith.divf %150, %151 : vector<56x32xf32>
    %153 = arith.mulf %147, %152 : vector<56x32xf32>
    %154 = vector.extract_strided_slice %7 {offsets = [396, 0], sizes = [1, 32], strides = [1, 1]} : vector<405x64xf32> to vector<1x32xf32>
    %155 = vector.broadcast %154 : vector<1x32xf32> to vector<56x32xf32>
    %156 = arith.mulf %153, %155 : vector<56x32xf32>
    %cst_35 = arith.constant dense<0.000000e+00> : vector<56xf32>
    %157 = vector.multi_reduction <add>, %156, %cst_35 [1] : vector<56x32xf32> to vector<56xf32>
    %158 = vector.shape_cast %157 : vector<56xf32> to vector<56x1xf32>
    %159 = vector.extract_strided_slice %7 {offsets = [397, 0], sizes = [1, 32], strides = [1, 1]} : vector<405x64xf32> to vector<1x32xf32>
    %160 = vector.extract_strided_slice %159 {offsets = [0, 0], sizes = [1, 1], strides = [1, 1]} : vector<1x32xf32> to vector<1x1xf32>
    %161 = vector.broadcast %160 : vector<1x1xf32> to vector<56x1xf32>
    %162 = arith.addf %158, %161 : vector<56x1xf32>
    %163 = arith.negf %162 : vector<56x1xf32>
    %164 = math.exp %163 : vector<56x1xf32>
    %cst_36 = arith.constant 1.000000e+00 : f32
    %165 = vector.broadcast %cst_36 : f32 to vector<56x1xf32>
    %166 = arith.addf %165, %164 : vector<56x1xf32>
    %167 = arith.divf %165, %166 : vector<56x1xf32>
    %168 = arith.mulf %167, %6 : vector<56x1xf32>
    %169 = vector.broadcast %168 : vector<56x1xf32> to vector<56x32xf32>
    %170 = arith.mulf %153, %169 : vector<56x32xf32>
    %cst_37 = arith.constant dense<0.000000e+00> : vector<8x32xf32>
    %171 = tpu.matmul %24, %170, %cst_37 {dimension_numbers = #tpu.dot_dimension_numbers<[1], [0], [0], [1], [0, 0, 1, 1], [], []>} : vector<8x56xf32>, vector<56x32xf32>, vector<8x32xf32> -> vector<8x32xf32>
    %cst_38 = arith.constant 0.00999999977 : f32
    %172 = vector.broadcast %cst_38 : f32 to vector<8x32xf32>
    %173 = arith.mulf %171, %172 : vector<8x32xf32>
    %174 = tpu.concatenate %117, %173 in 1 : vector<8x32xf32>, vector<8x32xf32> -> vector<8x64xf32>
    %175 = vector.extract_strided_slice %7 {offsets = [224, 0], sizes = [64, 32], strides = [1, 1]} : vector<405x64xf32> to vector<64x32xf32>
    %cst_39 = arith.constant dense<0.000000e+00> : vector<8x32xf32>
    %176 = tpu.matmul %174, %175, %cst_39 {dimension_numbers = #tpu.dot_dimension_numbers<[1], [0], [0], [1], [0, 0, 1, 1], [], []>} : vector<8x64xf32>, vector<64x32xf32>, vector<8x32xf32> -> vector<8x32xf32>
    %177 = vector.extract_strided_slice %7 {offsets = [398, 0], sizes = [1, 32], strides = [1, 1]} : vector<405x64xf32> to vector<1x32xf32>
    %178 = vector.broadcast %177 : vector<1x32xf32> to vector<8x32xf32>
    %179 = arith.addf %176, %178 : vector<8x32xf32>
    %180 = arith.negf %179 : vector<8x32xf32>
    %181 = math.exp %180 : vector<8x32xf32>
    %cst_40 = arith.constant 1.000000e+00 : f32
    %182 = vector.broadcast %cst_40 : f32 to vector<8x32xf32>
    %183 = arith.addf %182, %181 : vector<8x32xf32>
    %184 = arith.divf %182, %183 : vector<8x32xf32>
    %185 = arith.mulf %179, %184 : vector<8x32xf32>
    %186 = vector.extract_strided_slice %7 {offsets = [288, 0], sizes = [32, 32], strides = [1, 1]} : vector<405x64xf32> to vector<32x32xf32>
    %cst_41 = arith.constant dense<0.000000e+00> : vector<8x32xf32>
    %187 = tpu.matmul %185, %186, %cst_41 {dimension_numbers = #tpu.dot_dimension_numbers<[1], [0], [0], [1], [0, 0, 1, 1], [], []>} : vector<8x32xf32>, vector<32x32xf32>, vector<8x32xf32> -> vector<8x32xf32>
    %188 = arith.addf %117, %187 : vector<8x32xf32>
    %189 = vector.extract_strided_slice %7 {offsets = [399, 0], sizes = [1, 32], strides = [1, 1]} : vector<405x64xf32> to vector<1x32xf32>
    %190 = vector.broadcast %189 : vector<1x32xf32> to vector<8x32xf32>
    %191 = arith.addf %188, %190 : vector<8x32xf32>
    %192 = arith.mulf %191, %26 : vector<8x32xf32>
    %193 = vector.extract_strided_slice %7 {offsets = [320, 0], sizes = [32, 64], strides = [1, 1]} : vector<405x64xf32> to vector<32x64xf32>
    %cst_42 = arith.constant dense<0.000000e+00> : vector<8x64xf32>
    %194 = tpu.matmul %192, %193, %cst_42 {dimension_numbers = #tpu.dot_dimension_numbers<[1], [0], [0], [1], [0, 0, 1, 1], [], []>} : vector<8x32xf32>, vector<32x64xf32>, vector<8x64xf32> -> vector<8x64xf32>
    %195 = vector.extract_strided_slice %194 {offsets = [0, 0], sizes = [8, 32], strides = [1, 1]} : vector<8x64xf32> to vector<8x32xf32>
    %196 = vector.extract_strided_slice %194 {offsets = [0, 32], sizes = [8, 32], strides = [1, 1]} : vector<8x64xf32> to vector<8x32xf32>
    %197 = tpu.concatenate %195, %196 in 0 : vector<8x32xf32>, vector<8x32xf32> -> vector<16x32xf32>
    %cst_43 = arith.constant dense<0.000000e+00> : vector<56x32xf32>
    %198 = tpu.matmul %19, %197, %cst_43 {dimension_numbers = #tpu.dot_dimension_numbers<[1], [0], [0], [1], [0, 0, 1, 1], [], []>} : vector<56x16xf32>, vector<16x32xf32>, vector<56x32xf32> -> vector<56x32xf32>
    %199 = vector.extract_strided_slice %7 {offsets = [400, 0], sizes = [1, 32], strides = [1, 1]} : vector<405x64xf32> to vector<1x32xf32>
    %200 = vector.broadcast %40 : vector<56x1xf32> to vector<56x32xf32>
    %201 = vector.broadcast %199 : vector<1x32xf32> to vector<56x32xf32>
    %202 = arith.mulf %200, %201 : vector<56x32xf32>
    %203 = arith.addf %198, %202 : vector<56x32xf32>
    %204 = vector.extract_strided_slice %7 {offsets = [401, 0], sizes = [1, 32], strides = [1, 1]} : vector<405x64xf32> to vector<1x32xf32>
    %205 = vector.broadcast %4 : vector<56x1xf32> to vector<56x32xf32>
    %206 = vector.broadcast %204 : vector<1x32xf32> to vector<56x32xf32>
    %207 = arith.mulf %205, %206 : vector<56x32xf32>
    %208 = arith.addf %203, %207 : vector<56x32xf32>
    %209 = vector.extract_strided_slice %7 {offsets = [402, 0], sizes = [1, 32], strides = [1, 1]} : vector<405x64xf32> to vector<1x32xf32>
    %210 = vector.broadcast %209 : vector<1x32xf32> to vector<56x32xf32>
    %211 = arith.addf %208, %210 : vector<56x32xf32>
    %212 = arith.negf %211 : vector<56x32xf32>
    %213 = math.exp %212 : vector<56x32xf32>
    %cst_44 = arith.constant 1.000000e+00 : f32
    %214 = vector.broadcast %cst_44 : f32 to vector<56x32xf32>
    %215 = arith.addf %214, %213 : vector<56x32xf32>
    %216 = arith.divf %214, %215 : vector<56x32xf32>
    %217 = arith.mulf %211, %216 : vector<56x32xf32>
    %218 = vector.extract_strided_slice %7 {offsets = [352, 0], sizes = [32, 32], strides = [1, 1]} : vector<405x64xf32> to vector<32x32xf32>
    %cst_45 = arith.constant dense<0.000000e+00> : vector<56x32xf32>
    %219 = tpu.matmul %217, %218, %cst_45 {dimension_numbers = #tpu.dot_dimension_numbers<[1], [0], [0], [1], [0, 0, 1, 1], [], []>} : vector<56x32xf32>, vector<32x32xf32>, vector<56x32xf32> -> vector<56x32xf32>
    %220 = vector.extract_strided_slice %7 {offsets = [403, 0], sizes = [1, 32], strides = [1, 1]} : vector<405x64xf32> to vector<1x32xf32>
    %221 = vector.broadcast %220 : vector<1x32xf32> to vector<56x32xf32>
    %222 = arith.addf %219, %221 : vector<56x32xf32>
    %223 = arith.negf %222 : vector<56x32xf32>
    %224 = math.exp %223 : vector<56x32xf32>
    %cst_46 = arith.constant 1.000000e+00 : f32
    %225 = vector.broadcast %cst_46 : f32 to vector<56x32xf32>
    %226 = arith.addf %225, %224 : vector<56x32xf32>
    %227 = arith.divf %225, %226 : vector<56x32xf32>
    %228 = arith.mulf %222, %227 : vector<56x32xf32>
    %229 = vector.extract_strided_slice %7 {offsets = [404, 0], sizes = [1, 32], strides = [1, 1]} : vector<405x64xf32> to vector<1x32xf32>
    %230 = vector.broadcast %229 : vector<1x32xf32> to vector<56x32xf32>
    %231 = arith.mulf %228, %230 : vector<56x32xf32>
    %cst_47 = arith.constant dense<0.000000e+00> : vector<56xf32>
    %232 = vector.multi_reduction <add>, %231, %cst_47 [1] : vector<56x32xf32> to vector<56xf32>
    %233 = vector.shape_cast %232 : vector<56xf32> to vector<56x1xf32>
    %234 = arith.mulf %233, %6 : vector<56x1xf32>
    %235 = vector.broadcast %234 : vector<56x1xf32> to vector<56x3xf32>
    %236 = arith.mulf %47, %235 : vector<56x3xf32>
    %cst_48 = arith.constant dense<0.000000e+00> : vector<8x3xf32>
    %237 = tpu.matmul %24, %236, %cst_48 {dimension_numbers = #tpu.dot_dimension_numbers<[1], [0], [0], [1], [0, 0, 1, 1], [], []>} : vector<8x56xf32>, vector<56x3xf32>, vector<8x3xf32> -> vector<8x3xf32>
    %cst_49 = arith.constant 0.00999999977 : f32
    %238 = vector.broadcast %cst_49 : f32 to vector<8x3xf32>
    %239 = arith.mulf %237, %238 : vector<8x3xf32>
    %240 = arith.addf %1, %239 : vector<8x3xf32>
    %241 = vector.broadcast %5 : vector<8x1xf32> to vector<8x3xf32>
    %242 = arith.mulf %240, %241 : vector<8x3xf32>
    %243 = arith.mulf %192, %26 : vector<8x32xf32>
    %c0_50 = arith.constant 0 : index
    %c0_51 = arith.constant 0 : index
    %244 = vector.load %arg8[%c0_50, %c0_51] : memref<8x32xf32, #tpu.memory_space<vmem>>, vector<8x32xf32>
    tpu.vector_store %arg8[%c0_50, %c0_51], %243 {strides = array<i32>} : memref<8x32xf32, #tpu.memory_space<vmem>>, vector<8x32xf32>,
    %c0_52 = arith.constant 0 : index
    %c0_53 = arith.constant 0 : index
    %245 = vector.load %arg9[%c0_52, %c0_53] : memref<8x3xf32, #tpu.memory_space<vmem>>, vector<8x3xf32>
    tpu.vector_store %arg9[%c0_52, %c0_53], %242 {strides = array<i32>} : memref<8x3xf32, #tpu.memory_space<vmem>>, vector<8x3xf32>,
    return
  }
}

</mosaic_0001>

<llo_original>
// kernel: equivariant_block.1
$region0: #{equivariant_block.1}
  #allocation0 [shape = 'u32[]', space=smem, size = 0x4, offset = 0x4, fixed_abs, tag = 'smem constant byte address 0x4 - core index']
  #allocation1 [shape = 'u32[144,128]{1,0:T(1,128)}', space=vmem, size = 0x12000, scoped, tag = 'internal scratch']
  %s0 = inlined_call_operand.vmem [shape: f32[8,32], index: 0, kind: input, shape index: {}, may-alias: {0,8}]
  %s1 = inlined_call_operand.vmem [shape: f32[8,3], index: 1, kind: input, shape index: {}, may-alias: {1,9}]
  %s2 = inlined_call_operand.vmem [shape: s32[56,2], index: 2, kind: input, shape index: {}]
  %s3 = inlined_call_operand.vmem [shape: s32[1,56], index: 3, kind: input, shape index: {}]
  %s4 = inlined_call_operand.vmem [shape: f32[56,1], index: 4, kind: input, shape index: {}]
  %s5 = inlined_call_operand.vmem [shape: f32[8,1], index: 5, kind: input, shape index: {}]
  %s6 = inlined_call_operand.vmem [shape: f32[56,1], index: 6, kind: input, shape index: {}]
  %s7 = inlined_call_operand.vmem [shape: f32[405,64], index: 7, kind: input, shape index: {}]
  %s8 = inlined_call_operand.vmem [shape: f32[8,32], index: 8, kind: output, shape index: {0}, may-alias: {0,8}]
  %s9 = inlined_call_operand.vmem [shape: f32[8,3], index: 9, kind: output, shape index: {1}, may-alias: {1,9}]
  %10 = xla_tuple %s8, %s9
  %s11 = sld [smem:[#allocation0]]
  $region50: #{equivariant_block.1} parent=0
    _
  %s13 = ssub.s32 1, %s11
  %s14 = scalar_select 0, %s13, %s11
  // Predicated region
  $region2: #{equivariant_block.1} parent=0 // pred_check
    _
  $region3: #{equivariant_block.1} parent=0 // pred_check_branch
    %16 = sbr.rel (0) target = $region5
  $region4: #{equivariant_block.1} parent=0 // pred_region
    _
  $region5: #{equivariant_block.1} parent=0 // pred_fallthru
    _
  // Predicated region
  $region6: #{equivariant_block.1} parent=0 // pred_check
    _
  $region7: #{equivariant_block.1} parent=0 // pred_check_branch
    %18 = sbr.rel (0) target = $region9
  $region8: #{equivariant_block.1} parent=0 // pred_region
    _
  $region9: #{equivariant_block.1} parent=0 // pred_fallthru
    _
  // Predicated region
  $region10: #{equivariant_block.1} parent=0 // pred_check
    _
  $region11: #{equivariant_block.1} parent=0 // pred_check_branch
    %20 = sbr.rel (0) target = $region13
  $region12: #{equivariant_block.1} parent=0 // pred_region
    _
  $region13: #{equivariant_block.1} parent=0 // pred_fallthru
    _
  // Predicated region
  $region14: #{equivariant_block.1} parent=0 // pred_check
    _
  $region15: #{equivariant_block.1} parent=0 // pred_check_branch
    %22 = sbr.rel (0) target = $region17
  $region16: #{equivariant_block.1} parent=0 // pred_region
    _
  $region17: #{equivariant_block.1} parent=0 // pred_fallthru
    _
  // Predicated region
  $region18: #{equivariant_block.1} parent=0 // pred_check
    _
  $region19: #{equivariant_block.1} parent=0 // pred_check_branch
    %24 = sbr.rel (0) target = $region21
  $region20: #{equivariant_block.1} parent=0 // pred_region
    _
  $region21: #{equivariant_block.1} parent=0 // pred_fallthru
    _
  // Predicated region
  $region22: #{equivariant_block.1} parent=0 // pred_check
    _
  $region23: #{equivariant_block.1} parent=0 // pred_check_branch
    %26 = sbr.rel (0) target = $region25
  $region24: #{equivariant_block.1} parent=0 // pred_region
    _
  $region25: #{equivariant_block.1} parent=0 // pred_fallthru
    _
  // Predicated region
  $region26: #{equivariant_block.1} parent=0 // pred_check
    _
  $region27: #{equivariant_block.1} parent=0 // pred_check_branch
    %28 = sbr.rel (0) target = $region29
  $region28: #{equivariant_block.1} parent=0 // pred_region
    _
  $region29: #{equivariant_block.1} parent=0 // pred_fallthru
    _
  // Predicated region
  $region30: #{equivariant_block.1} parent=0 // pred_check
    _
  $region31: #{equivariant_block.1} parent=0 // pred_check_branch
    %30 = sbr.rel (0) target = $region33
  $region32: #{equivariant_block.1} parent=0 // pred_region
    _
  $region33: #{equivariant_block.1} parent=0 // pred_fallthru
    _
  %v31 = vld [vmem:[%s0] sm:$0xff]
  %v32 = vld [vmem:[%s1] sm:$0xff]
  %v33 = vld [vmem:[%s2] sm:$0xff]
  %v34 = vld [vmem:[%s2 + $0x8] sm:$0xff]
  %v35 = vld [vmem:[%s2 + $0x10] sm:$0xff]
  %v36 = vld [vmem:[%s2 + $0x18] sm:$0xff]
  %v37 = vld [vmem:[%s2 + $0x20] sm:$0xff]
  %v38 = vld [vmem:[%s2 + $0x28] sm:$0xff]
  %v39 = vld [vmem:[%s2 + $0x30] sm:$0xff]
  %v40 = vld [vmem:[%s3] sm:$0x1]
  %v41 = vld [vmem:[%s4] sm:$0xff]
  %v42 = vld [vmem:[%s4 + $0x8] sm:$0xff]
  %v43 = vld [vmem:[%s4 + $0x10] sm:$0xff]
  %v44 = vld [vmem:[%s4 + $0x18] sm:$0xff]
  %v45 = vld [vmem:[%s4 + $0x20] sm:$0xff]
  %v46 = vld [vmem:[%s4 + $0x28] sm:$0xff]
  %v47 = vld [vmem:[%s4 + $0x30] sm:$0xff]
  %v48 = vld [vmem:[%s5] sm:$0xff]
  %v49 = vld [vmem:[%s6] sm:$0xff]
  %v50 = vld [vmem:[%s6 + $0x8] sm:$0xff]
  %v51 = vld [vmem:[%s6 + $0x10] sm:$0xff]
  %v52 = vld [vmem:[%s6 + $0x18] sm:$0xff]
  %v53 = vld [vmem:[%s6 + $0x20] sm:$0xff]
  %v54 = vld [vmem:[%s6 + $0x28] sm:$0xff]
  %v55 = vld [vmem:[%s6 + $0x30] sm:$0xff]
  %v56 = vld [vmem:[%s7] sm:$0xff]
  %v57 = vld [vmem:[%s7 + $0x8] sm:$0xff]
  %v58 = vld [vmem:[%s7 + $0x10] sm:$0xff]
  %v59 = vld [vmem:[%s7 + $0x18] sm:$0xff]
  %v60 = vld [vmem:[%s7 + $0x20] sm:$0xff]
  %v61 = vld [vmem:[%s7 + $0x28] sm:$0xff]
  %v62 = vld [vmem:[%s7 + $0x30] sm:$0xff]
  %v63 = vld [vmem:[%s7 + $0x38] sm:$0xff]
  %v64 = vld [vmem:[%s7 + $0x40] sm:$0xff]
  %v65 = vld [vmem:[%s7 + $0x48] sm:$0xff]
  %v66 = vld [vmem:[%s7 + $0x50] sm:$0xff]
  %v67 = vld [vmem:[%s7 + $0x58] sm:$0xff]
  %v68 = vld [vmem:[%s7 + $0x60] sm:$0xff]
  %v69 = vld [vmem:[%s7 + $0x68] sm:$0xff]
  %v70 = vld [vmem:[%s7 + $0x70] sm:$0xff]
  %v71 = vld [vmem:[%s7 + $0x78] sm:$0xff]
  %v72 = vld [vmem:[%s7 + $0x80] sm:$0xff]
  %v73 = vld [vmem:[%s7 + $0x88] sm:$0xff]
  %v74 = vld [vmem:[%s7 + $0x90] sm:$0xff]
  %v75 = vld [vmem:[%s7 + $0x98] sm:$0xff]
  %v76 = vld [vmem:[%s7 + $0xa0] sm:$0xff]
  %v77 = vld [vmem:[%s7 + $0xa8] sm:$0xff]
  %v78 = vld [vmem:[%s7 + $0xb0] sm:$0xff]
  %v79 = vld [vmem:[%s7 + $0xb8] sm:$0xff]
  %v80 = vld [vmem:[%s7 + $0xc0] sm:$0xff]
  %v81 = vld [vmem:[%s7 + $0xc8] sm:$0xff]
  %v82 = vld [vmem:[%s7 + $0xd0] sm:$0xff]
  %v83 = vld [vmem:[%s7 + $0xd8] sm:$0xff]
  %v84 = vld [vmem:[%s7 + $0xe0] sm:$0xff]
  %v85 = vld [vmem:[%s7 + $0xe8] sm:$0xff]
  %v86 = vld [vmem:[%s7 + $0xf0] sm:$0xff]
  %v87 = vld [vmem:[%s7 + $0xf8] sm:$0xff]
  %v88 = vld [vmem:[%s7 + $0x100] sm:$0xff]
  %v89 = vld [vmem:[%s7 + $0x108] sm:$0xff]
  %v90 = vld [vmem:[%s7 + $0x110] sm:$0xff]
  %v91 = vld [vmem:[%s7 + $0x118] sm:$0xff]
  %v92 = vld [vmem:[%s7 + $0x120] sm:$0xff]
  %v93 = vld [vmem:[%s7 + $0x128] sm:$0xff]
  %v94 = vld [vmem:[%s7 + $0x130] sm:$0xff]
  %v95 = vld [vmem:[%s7 + $0x138] sm:$0xff]
  %v96 = vld [vmem:[%s7 + $0x140] sm:$0xff]
  %v97 = vld [vmem:[%s7 + $0x148] sm:$0xff]
  %v98 = vld [vmem:[%s7 + $0x150] sm:$0xff]
  %v99 = vld [vmem:[%s7 + $0x158] sm:$0xff]
  %v100 = vld [vmem:[%s7 + $0x160] sm:$0xff]
  %v101 = vld [vmem:[%s7 + $0x168] sm:$0xff]
  %v102 = vld [vmem:[%s7 + $0x170] sm:$0xff]
  %v103 = vld [vmem:[%s7 + $0x178] sm:$0xff]
  %v104 = vld [vmem:[%s7 + $0x180] sm:$0xff]
  %v105 = vld [vmem:[%s7 + $0x188] sm:$0xff]
  %v106 = vld [vmem:[%s7 + $0x190] sm:$0x1f]
  %v107 = vlaneseq
  %v108 = vand.u32 %v107, 127
  %109 = vset.pattern.permute.xlu0 0
  %110 = vperm.xlu0 %109, %v33
  %v111 = vpop.permute.xlu0 %110
  %112 = vset.pattern.permute.xlu0 0
  %113 = vperm.xlu0 %112, %v34
  %v114 = vpop.permute.xlu0 %113
  %115 = vset.pattern.permute.xlu0 0
  %116 = vperm.xlu0 %115, %v35
  %v117 = vpop.permute.xlu0 %116
  %118 = vset.pattern.permute.xlu0 0
  %119 = vperm.xlu0 %118, %v36
  %v120 = vpop.permute.xlu0 %119
  %121 = vset.pattern.permute.xlu0 0
  %122 = vperm.xlu0 %121, %v37
  %v123 = vpop.permute.xlu0 %122
  %124 = vset.pattern.permute.xlu0 0
  %125 = vperm.xlu0 %124, %v38
  %v126 = vpop.permute.xlu0 %125
  %127 = vset.pattern.permute.xlu0 0
  %128 = vperm.xlu0 %127, %v39
  %v129 = vpop.permute.xlu0 %128
  %vm130 = vcmp.eq.s32.totalorder %v108, %v111
  %vm131 = vcmp.eq.s32.totalorder %v108, %v114
  %vm132 = vcmp.eq.s32.totalorder %v108, %v117
  %vm133 = vcmp.eq.s32.totalorder %v108, %v120
  %vm134 = vcmp.eq.s32.totalorder %v108, %v123
  %vm135 = vcmp.eq.s32.totalorder %v108, %v126
  %vm136 = vcmp.eq.s32.totalorder %v108, %v129
  %v137 = vadd.s32 %v33, 8
  %v138 = vadd.s32 %v34, 8
  %v139 = vadd.s32 %v35, 8
  %v140 = vadd.s32 %v36, 8
  %v141 = vadd.s32 %v37, 8
  %v142 = vadd.s32 %v38, 8
  %v143 = vadd.s32 %v39, 8
  %144 = vset.pattern.permute.xlu0 1
  %145 = vperm.xlu0 %144, %v137
  %v146 = vpop.permute.xlu0 %145
  %147 = vset.pattern.permute.xlu0 1
  %148 = vperm.xlu0 %147, %v138
  %v149 = vpop.permute.xlu0 %148
  %150 = vset.pattern.permute.xlu0 1
  %151 = vperm.xlu0 %150, %v139
  %v152 = vpop.permute.xlu0 %151
  %153 = vset.pattern.permute.xlu0 1
  %154 = vperm.xlu0 %153, %v140
  %v155 = vpop.permute.xlu0 %154
  %156 = vset.pattern.permute.xlu0 1
  %157 = vperm.xlu0 %156, %v141
  %v158 = vpop.permute.xlu0 %157
  %159 = vset.pattern.permute.xlu0 1
  %160 = vperm.xlu0 %159, %v142
  %v161 = vpop.permute.xlu0 %160
  %162 = vset.pattern.permute.xlu0 1
  %163 = vperm.xlu0 %162, %v143
  %v164 = vpop.permute.xlu0 %163
  %vm165 = vcmp.eq.s32.totalorder %v108, %v146
  %vm166 = vcmp.eq.s32.totalorder %v108, %v149
  %vm167 = vcmp.eq.s32.totalorder %v108, %v152
  %vm168 = vcmp.eq.s32.totalorder %v108, %v155
  %vm169 = vcmp.eq.s32.totalorder %v108, %v158
  %vm170 = vcmp.eq.s32.totalorder %v108, %v161
  %vm171 = vcmp.eq.s32.totalorder %v108, %v164
  %vm172 = vmor %vm130, %vm165
  %vm173 = vmor %vm131, %vm166
  %vm174 = vmor %vm132, %vm167
  %vm175 = vmor %vm133, %vm168
  %vm176 = vmor %vm134, %vm169
  %vm177 = vmor %vm135, %vm170
  %vm178 = vmor %vm136, %vm171
  %v179 = vsel %vm172, 1, 0
  %v180 = vsel %vm173, 1, 0
  %v181 = vsel %vm174, 1, 0
  %v182 = vsel %vm175, 1, 0
  %v183 = vsel %vm176, 1, 0
  %v184 = vsel %vm177, 1, 0
  %v185 = vsel %vm178, 1, 0
  %v186 = vcvt.s32.f32 %v179
  %v187 = vcvt.s32.f32 %v180
  %v188 = vcvt.s32.f32 %v181
  %v189 = vcvt.s32.f32 %v182
  %v190 = vcvt.s32.f32 %v183
  %v191 = vcvt.s32.f32 %v184
  %v192 = vcvt.s32.f32 %v185
  %v193 = vlaneseq
  %v194 = vshrl.u32 %v193, 7
  %v195 = vlaneseq
  %v196 = vshrl.u32 %v195, 7
  %v197 = vsub.s32 0, %v196
  %v198 = vrot.slane %v40, %v197
  %vm199 = vcmp.eq.s32.totalorder %v194, %v198
  %v200 = vsel %vm199, 1, 0
  %v201 = vcvt.s32.f32 %v200
  %203 = vset.pattern.permute.xlu0 0
  %204 = vperm.xlu0 %203, %v48
  %v205 = vpop.permute.xlu0 %204
  %v207 = vsub.f32 0.0, %v32
  %vm208 = vcmask 261120
  %v210 = vsel %vm208, %v31, 0
  %212 = vmatprep.subr.mxu0 0.0
  %213 = vmatpush1.msra.mxu0 0.0
  %214 = vmatprep.subr.mxu0 0.0
  %215 = vmatpush1.msra.mxu0 0.0
  %216 = vmatprep.subr.mxu0 0.0
  %217 = vmatpush1.msra.mxu0 0.0
  %218 = vmatprep.subr.mxu0 0.0
  %219 = vmatpush1.msra.mxu0 0.0
  %220 = vmatprep.subr.mxu0 0.0
  %221 = vmatpush1.msra.mxu0 0.0
  %222 = vmatprep.subr.mxu0 0.0
  %223 = vmatpush1.msra.mxu0 0.0
  %224 = vmatprep.subr.mxu0 0.0
  %225 = vmatpush1.msra.mxu0 0.0
  %226 = vmatprep.subr.mxu0 0.0
  %227 = vmatpush1.msra.mxu0 0.0
  %228 = vmatprep.subr.mxu0 0.0
  %229 = vmatpush1.msra.mxu0 0.0
  %230 = vmatprep.subr.mxu0 0.0
  %231 = vmatpush1.msra.mxu0 0.0
  %232 = vmatprep.subr.mxu0 0.0
  %233 = vmatpush1.msra.mxu0 0.0
  %234 = vmatprep.subr.mxu0 0.0
  %235 = vmatpush1.msra.mxu0 0.0
  %236 = vmatprep.subr.mxu0 0.0
  %237 = vmatpush1.msra.mxu0 %v59
  %238 = vmatprep.subr.mxu0 0.0
  %239 = vmatpush1.msra.mxu0 %v58
  %240 = vmatprep.subr.mxu0 0.0
  %241 = vmatpush1.msra.mxu0 %v57
  %242 = vmatprep.subr.mxu0 0.0
  %243 = vmatpush1.msra.mxu0 %v56
  %244 = vmatprep.subr.mxu0 0.0
  %245 = vmatpush2.msra.mxu0 0.0
  %246 = vmatprep.subr.mxu0 0.0
  %247 = vmatpush2.msra.mxu0 0.0
  %248 = vmatprep.subr.mxu0 0.0
  %249 = vmatpush2.msra.mxu0 0.0
  %250 = vmatprep.subr.mxu0 0.0
  %251 = vmatpush2.msra.mxu0 0.0
  %252 = vmatprep.subr.mxu0 0.0
  %253 = vmatpush2.msra.mxu0 0.0
  %254 = vmatprep.subr.mxu0 0.0
  %255 = vmatpush2.msra.mxu0 0.0
  %256 = vmatprep.subr.mxu0 0.0
  %257 = vmatpush2.msra.mxu0 0.0
  %258 = vmatprep.subr.mxu0 0.0
  %259 = vmatpush2.msra.mxu0 0.0
  %260 = vmatprep.subr.mxu0 0.0
  %261 = vmatpush2.msra.mxu0 0.0
  %262 = vmatprep.subr.mxu0 0.0
  %263 = vmatpush2.msra.mxu0 0.0
  %264 = vmatprep.subr.mxu0 0.0
  %265 = vmatpush2.msra.mxu0 0.0
  %266 = vmatprep.subr.mxu0 0.0
  %267 = vmatpush2.msra.mxu0 0.0
  %268 = vmatprep.subr.mxu0 0.0
  %269 = vmatpush2.msra.mxu0 0.0
  %270 = vmatprep.subr.mxu0 0.0
  %271 = vmatpush2.msra.mxu0 0.0
  %272 = vmatprep.subr.mxu0 0.0
  %273 = vmatpush2.msra.mxu0 0.0
  %274 = vmatprep.subr.mxu0 0.0
  %275 = vmatpush2.msra.mxu0 0.0
  %276 = vmatprep.mubr.f32.mxu0 0.0
  %277 = vmatmul.mubr.f32.gmra.mxu0 %v210
  %v278 = vpop.f32.mrf.mxu0
  %v279 = vadd.f32 0.0, %v278
  %v280 = vpop.f32.mrf.mxu0
  %281 = vdwg.mxu0
  %283 = vrot.lane.b32.xlu0 %v279, 96
  %v284 = vpop.permute.xlu0 %283
  %288 = vrot.lane.b32.xlu0 %v32, 32
  %v289 = vpop.permute.xlu0 %288
  %290 = vrot.lane.b32.xlu0 %v207, 32
  %v291 = vpop.permute.xlu0 %290
  %v294 = vsel %vm208, %v279, %v289
  %v295 = vsel %vm208, %v284, %v291
  %vm296 = vcmask 130048
  %v298 = vsel %vm296, %v186, 0
  %v301 = vsel %vm296, %v187, 0
  %v304 = vsel %vm296, %v188, 0
  %v307 = vsel %vm296, %v189, 0
  %v310 = vsel %vm296, %v190, 0
  %v313 = vsel %vm296, %v191, 0
  %v316 = vsel %vm296, %v192, 0
  %318 = vmatprep.subr.mxu0 0.0
  %319 = vmatpush1.msra.mxu0 0.0
  %320 = vmatprep.subr.mxu0 0.0
  %321 = vmatpush1.msra.mxu0 0.0
  %322 = vmatprep.subr.mxu0 0.0
  %323 = vmatpush1.msra.mxu0 0.0
  %324 = vmatprep.subr.mxu0 0.0
  %325 = vmatpush1.msra.mxu0 0.0
  %326 = vmatprep.subr.mxu0 0.0
  %327 = vmatpush1.msra.mxu0 0.0
  %328 = vmatprep.subr.mxu0 0.0
  %329 = vmatpush1.msra.mxu0 0.0
  %330 = vmatprep.subr.mxu0 0.0
  %331 = vmatpush1.msra.mxu0 0.0
  %332 = vmatprep.subr.mxu0 0.0
  %333 = vmatpush1.msra.mxu0 0.0
  %334 = vmatprep.subr.mxu0 0.0
  %335 = vmatpush1.msra.mxu0 0.0
  %336 = vmatprep.subr.mxu0 0.0
  %337 = vmatpush1.msra.mxu0 0.0
  %338 = vmatprep.subr.mxu0 0.0
  %339 = vmatpush1.msra.mxu0 0.0
  %340 = vmatprep.subr.mxu0 0.0
  %341 = vmatpush1.msra.mxu0 0.0
  %342 = vmatprep.subr.mxu0 0.0
  %343 = vmatpush1.msra.mxu0 0.0
  %344 = vmatprep.subr.mxu0 0.0
  %345 = vmatpush1.msra.mxu0 0.0
  %346 = vmatprep.subr.mxu0 0.0
  %347 = vmatpush1.msra.mxu0 %v295
  %348 = vmatprep.subr.mxu0 0.0
  %349 = vmatpush1.msra.mxu0 %v294
  %350 = vmatprep.subr.mxu0 0.0
  %351 = vmatpush2.msra.mxu0 0.0
  %352 = vmatprep.subr.mxu0 0.0
  %353 = vmatpush2.msra.mxu0 0.0
  %354 = vmatprep.subr.mxu0 0.0
  %355 = vmatpush2.msra.mxu0 0.0
  %356 = vmatprep.subr.mxu0 0.0
  %357 = vmatpush2.msra.mxu0 0.0
  %358 = vmatprep.subr.mxu0 0.0
  %359 = vmatpush2.msra.mxu0 0.0
  %360 = vmatprep.subr.mxu0 0.0
  %361 = vmatpush2.msra.mxu0 0.0
  %362 = vmatprep.subr.mxu0 0.0
  %363 = vmatpush2.msra.mxu0 0.0
  %364 = vmatprep.subr.mxu0 0.0
  %365 = vmatpush2.msra.mxu0 0.0
  %366 = vmatprep.subr.mxu0 0.0
  %367 = vmatpush2.msra.mxu0 0.0
  %368 = vmatprep.subr.mxu0 0.0
  %369 = vmatpush2.msra.mxu0 0.0
  %370 = vmatprep.subr.mxu0 0.0
  %371 = vmatpush2.msra.mxu0 0.0
  %372 = vmatprep.subr.mxu0 0.0
  %373 = vmatpush2.msra.mxu0 0.0
  %374 = vmatprep.subr.mxu0 0.0
  %375 = vmatpush2.msra.mxu0 0.0
  %376 = vmatprep.subr.mxu0 0.0
  %377 = vmatpush2.msra.mxu0 0.0
  %378 = vmatprep.subr.mxu0 0.0
  %379 = vmatpush2.msra.mxu0 0.0
  %380 = vmatprep.subr.mxu0 0.0
  %381 = vmatpush2.msra.mxu0 0.0
  %382 = vmatprep.mubr.f32.mxu0 0.0
  %383 = vmatmul.mubr.f32.gmra.mxu0 %v298
  %v384 = vpop.f32.mrf.mxu0
  %v385 = vadd.f32 0.0, %v384
  %v386 = vpop.f32.mrf.mxu0
  %387 = vmatprep.mubr.f32.mxu0 0.0
  %388 = vmatmul.mubr.f32.gmra.mxu0 %v301
  %v389 = vpop.f32.mrf.mxu0
  %v390 = vadd.f32 0.0, %v389
  %v391 = vpop.f32.mrf.mxu0
  %392 = vmatprep.mubr.f32.mxu0 0.0
  %393 = vmatmul.mubr.f32.gmra.mxu0 %v304
  %v394 = vpop.f32.mrf.mxu0
  %v395 = vadd.f32 0.0, %v394
  %v396 = vpop.f32.mrf.mxu0
  %397 = vmatprep.mubr.f32.mxu0 0.0
  %398 = vmatmul.mubr.f32.gmra.mxu0 %v307
  %v399 = vpop.f32.mrf.mxu0
  %v400 = vadd.f32 0.0, %v399
  %v401 = vpop.f32.mrf.mxu0
  %402 = vmatprep.mubr.f32.mxu0 0.0
  %403 = vmatmul.mubr.f32.gmra.mxu0 %v310
  %v404 = vpop.f32.mrf.mxu0
  %v405 = vadd.f32 0.0, %v404
  %v406 = vpop.f32.mrf.mxu0
  %407 = vmatprep.mubr.f32.mxu0 0.0
  %408 = vmatmul.mubr.f32.gmra.mxu0 %v313
  %v409 = vpop.f32.mrf.mxu0
  %v410 = vadd.f32 0.0, %v409
  %v411 = vpop.f32.mrf.mxu0
  %412 = vmatprep.mubr.f32.mxu0 0.0
  %413 = vmatmul.mubr.f32.gmra.mxu0 %v316
  %v414 = vpop.f32.mrf.mxu0
  %v415 = vadd.f32 0.0, %v414
  %v416 = vpop.f32.mrf.mxu0
  %417 = vdwg.mxu0
  %v418 = vmul.f32 %v385, %v385
  %v419 = vmul.f32 %v390, %v390
  %v420 = vmul.f32 %v395, %v395
  %v421 = vmul.f32 %v400, %v400
  %v422 = vmul.f32 %v405, %v405
  %v423 = vmul.f32 %v410, %v410
  %v424 = vmul.f32 %v415, %v415
  %432 = vrot.lane.b32.xlu0 %v418, 96
  %v433 = vpop.permute.xlu0 %432
  %434 = vrot.lane.b32.xlu0 %v419, 96
  %v435 = vpop.permute.xlu0 %434
  %436 = vrot.lane.b32.xlu0 %v420, 96
  %v437 = vpop.permute.xlu0 %436
  %438 = vrot.lane.b32.xlu0 %v421, 96
  %v439 = vpop.permute.xlu0 %438
  %440 = vrot.lane.b32.xlu0 %v422, 96
  %v441 = vpop.permute.xlu0 %440
  %442 = vrot.lane.b32.xlu0 %v423, 96
  %v443 = vpop.permute.xlu0 %442
  %444 = vrot.lane.b32.xlu0 %v424, 96
  %v445 = vpop.permute.xlu0 %444
  %vm453 = vcmask 23552
  %v454 = vsel %vm453, %v433, 0.0
  %455 = vadd.xlane.f32.xlu0 %v454
  %v456 = vpop.xlane.xlu0 %455
  %v457 = vsel %vm453, %v435, 0.0
  %458 = vadd.xlane.f32.xlu0 %v457
  %v459 = vpop.xlane.xlu0 %458
  %v460 = vsel %vm453, %v437, 0.0
  %461 = vadd.xlane.f32.xlu0 %v460
  %v462 = vpop.xlane.xlu0 %461
  %v463 = vsel %vm453, %v439, 0.0
  %464 = vadd.xlane.f32.xlu0 %v463
  %v465 = vpop.xlane.xlu0 %464
  %v466 = vsel %vm453, %v441, 0.0
  %467 = vadd.xlane.f32.xlu0 %v466
  %v468 = vpop.xlane.xlu0 %467
  %v469 = vsel %vm453, %v443, 0.0
  %470 = vadd.xlane.f32.xlu0 %v469
  %v471 = vpop.xlane.xlu0 %470
  %v472 = vsel %vm453, %v445, 0.0
  %473 = vadd.xlane.f32.xlu0 %v472
  %v474 = vpop.xlane.xlu0 %473
  %v475 = vadd.f32 %v456, 1e-08
  %v476 = vadd.f32 %v459, 1e-08
  %v477 = vadd.f32 %v462, 1e-08
  %v478 = vadd.f32 %v465, 1e-08
  %v479 = vadd.f32 %v468, 1e-08
  %v480 = vadd.f32 %v471, 1e-08
  %v481 = vadd.f32 %v474, 1e-08
  %v482 = vrsqrt.pop %v475
  %v483 = vmul.f32 %v475, %v482
  %vm484 = vcmp.eq.f32.partialorder %v475, inf
  %v485 = vsel %vm484, %v475, %v483
  %vm486 = vcmp.eq.f32.partialorder %v475, 0.0
  %v487 = vand.u32 %v475, 2147483648
  %v488 = vsel %vm486, %v487, %v485
  %v489 = vrsqrt.pop %v476
  %v490 = vmul.f32 %v476, %v489
  %vm491 = vcmp.eq.f32.partialorder %v476, inf
  %v492 = vsel %vm491, %v476, %v490
  %vm493 = vcmp.eq.f32.partialorder %v476, 0.0
  %v494 = vand.u32 %v476, 2147483648
  %v495 = vsel %vm493, %v494, %v492
  %v496 = vrsqrt.pop %v477
  %v497 = vmul.f32 %v477, %v496
  %vm498 = vcmp.eq.f32.partialorder %v477, inf
  %v499 = vsel %vm498, %v477, %v497
  %vm500 = vcmp.eq.f32.partialorder %v477, 0.0
  %v501 = vand.u32 %v477, 2147483648
  %v502 = vsel %vm500, %v501, %v499
  %v503 = vrsqrt.pop %v478
  %v504 = vmul.f32 %v478, %v503
  %vm505 = vcmp.eq.f32.partialorder %v478, inf
  %v506 = vsel %vm505, %v478, %v504
  %vm507 = vcmp.eq.f32.partialorder %v478, 0.0
  %v508 = vand.u32 %v478, 2147483648
  %v509 = vsel %vm507, %v508, %v506
  %v510 = vrsqrt.pop %v479
  %v511 = vmul.f32 %v479, %v510
  %vm512 = vcmp.eq.f32.partialorder %v479, inf
  %v513 = vsel %vm512, %v479, %v511
  %vm514 = vcmp.eq.f32.partialorder %v479, 0.0
  %v515 = vand.u32 %v479, 2147483648
  %v516 = vsel %vm514, %v515, %v513
  %v517 = vrsqrt.pop %v480
  %v518 = vmul.f32 %v480, %v517
  %vm519 = vcmp.eq.f32.partialorder %v480, inf
  %v520 = vsel %vm519, %v480, %v518
  %vm521 = vcmp.eq.f32.partialorder %v480, 0.0
  %v522 = vand.u32 %v480, 2147483648
  %v523 = vsel %vm521, %v522, %v520
  %v524 = vrsqrt.pop %v481
  %v525 = vmul.f32 %v481, %v524
  %vm526 = vcmp.eq.f32.partialorder %v481, inf
  %v527 = vsel %vm526, %v481, %v525
  %vm528 = vcmp.eq.f32.partialorder %v481, 0.0
  %v529 = vand.u32 %v481, 2147483648
  %v530 = vsel %vm528, %v529, %v527
  %v531 = vadd.f32 %v488, 1.0
  %v532 = vadd.f32 %v495, 1.0
  %v533 = vadd.f32 %v502, 1.0
  %v534 = vadd.f32 %v509, 1.0
  %v535 = vadd.f32 %v516, 1.0
  %v536 = vadd.f32 %v523, 1.0
  %v537 = vadd.f32 %v530, 1.0
  %v538 = vrcp.pop %v531
  %v539 = vmul.f32 %v385, %v538
  %v540 = vrcp.pop %v532
  %v541 = vmul.f32 %v390, %v540
  %v542 = vrcp.pop %v533
  %v543 = vmul.f32 %v395, %v542
  %v544 = vrcp.pop %v534
  %v545 = vmul.f32 %v400, %v544
  %v546 = vrcp.pop %v535
  %v547 = vmul.f32 %v405, %v546
  %v548 = vrcp.pop %v536
  %v549 = vmul.f32 %v410, %v548
  %v550 = vrcp.pop %v537
  %v551 = vmul.f32 %v415, %v550
  %v552 = vlaneseq
  %v553 = vshrl.u32 %v552, 7
  %v554 = vsub.s32 0, %v553
  %v555 = vrot.slane %v104, %v554
  %v556 = vmul.f32 %v456, %v555
  %v557 = vmul.f32 %v459, %v555
  %v558 = vmul.f32 %v462, %v555
  %v559 = vmul.f32 %v465, %v555
  %v560 = vmul.f32 %v468, %v555
  %v561 = vmul.f32 %v471, %v555
  %v562 = vmul.f32 %v474, %v555
  %v563 = vadd.f32 %v385, %v556
  %v564 = vadd.f32 %v390, %v557
  %v565 = vadd.f32 %v395, %v558
  %v566 = vadd.f32 %v400, %v559
  %v567 = vadd.f32 %v405, %v560
  %v568 = vadd.f32 %v410, %v561
  %v569 = vadd.f32 %v415, %v562
  %571 = vset.pattern.permute.xlu0 0
  %572 = vperm.xlu0 %571, %v41
  %v573 = vpop.permute.xlu0 %572
  %576 = vset.pattern.permute.xlu0 0
  %577 = vperm.xlu0 %576, %v42
  %v578 = vpop.permute.xlu0 %577
  %581 = vset.pattern.permute.xlu0 0
  %582 = vperm.xlu0 %581, %v43
  %v583 = vpop.permute.xlu0 %582
  %586 = vset.pattern.permute.xlu0 0
  %587 = vperm.xlu0 %586, %v44
  %v588 = vpop.permute.xlu0 %587
  %591 = vset.pattern.permute.xlu0 0
  %592 = vperm.xlu0 %591, %v45
  %v593 = vpop.permute.xlu0 %592
  %596 = vset.pattern.permute.xlu0 0
  %597 = vperm.xlu0 %596, %v46
  %v598 = vpop.permute.xlu0 %597
  %601 = vset.pattern.permute.xlu0 0
  %602 = vperm.xlu0 %601, %v47
  %v603 = vpop.permute.xlu0 %602
  %v605 = vlaneseq
  %v606 = vshrl.u32 %v605, 7
  %v607 = vsub.s32 1, %v606
  %v608 = vrot.slane %v104, %v607
  %v609 = vmul.f32 %v573, %v608
  %v610 = vmul.f32 %v578, %v608
  %v611 = vmul.f32 %v583, %v608
  %v612 = vmul.f32 %v588, %v608
  %v613 = vmul.f32 %v593, %v608
  %v614 = vmul.f32 %v598, %v608
  %v615 = vmul.f32 %v603, %v608
  %v616 = vadd.f32 %v563, %v609
  %v617 = vadd.f32 %v564, %v610
  %v618 = vadd.f32 %v565, %v611
  %v619 = vadd.f32 %v566, %v612
  %v620 = vadd.f32 %v567, %v613
  %v621 = vadd.f32 %v568, %v614
  %v622 = vadd.f32 %v569, %v615
  %v623 = vlaneseq
  %v624 = vshrl.u32 %v623, 7
  %v625 = vsub.s32 2, %v624
  %v626 = vrot.slane %v104, %v625
  %v627 = vadd.f32 %v616, %v626
  %v628 = vadd.f32 %v617, %v626
  %v629 = vadd.f32 %v618, %v626
  %v630 = vadd.f32 %v619, %v626
  %v631 = vadd.f32 %v620, %v626
  %v632 = vadd.f32 %v621, %v626
  %v633 = vadd.f32 %v622, %v626
  %v634 = vxor.u32 %v627, 2147483648
  %v635 = vxor.u32 %v628, 2147483648
  %v636 = vxor.u32 %v629, 2147483648
  %v637 = vxor.u32 %v630, 2147483648
  %v638 = vxor.u32 %v631, 2147483648
  %v639 = vxor.u32 %v632, 2147483648
  %v640 = vxor.u32 %v633, 2147483648
  %v641 = vmul.f32 %v634, 1.442695
  %v642 = vpow.pop %v641
  %v643 = vmul.f32 %v635, 1.442695
  %v644 = vpow.pop %v643
  %v645 = vmul.f32 %v636, 1.442695
  %v646 = vpow.pop %v645
  %v647 = vmul.f32 %v637, 1.442695
  %v648 = vpow.pop %v647
  %v649 = vmul.f32 %v638, 1.442695
  %v650 = vpow.pop %v649
  %v651 = vmul.f32 %v639, 1.442695
  %v652 = vpow.pop %v651
  %v653 = vmul.f32 %v640, 1.442695
  %v654 = vpow.pop %v653
  %v655 = vadd.f32 %v642, 1.0
  %v656 = vadd.f32 %v644, 1.0
  %v657 = vadd.f32 %v646, 1.0
  %v658 = vadd.f32 %v648, 1.0
  %v659 = vadd.f32 %v650, 1.0
  %v660 = vadd.f32 %v652, 1.0
  %v661 = vadd.f32 %v654, 1.0
  %v662 = vrcp.pop %v655
  %v663 = vmul.f32 1.0, %v662
  %v664 = vrcp.pop %v656
  %v665 = vmul.f32 1.0, %v664
  %v666 = vrcp.pop %v657
  %v667 = vmul.f32 1.0, %v666
  %v668 = vrcp.pop %v658
  %v669 = vmul.f32 1.0, %v668
  %v670 = vrcp.pop %v659
  %v671 = vmul.f32 1.0, %v670
  %v672 = vrcp.pop %v660
  %v673 = vmul.f32 1.0, %v672
  %v674 = vrcp.pop %v661
  %v675 = vmul.f32 1.0, %v674
  %v676 = vmul.f32 %v627, %v663
  %v677 = vmul.f32 %v628, %v665
  %v678 = vmul.f32 %v629, %v667
  %v679 = vmul.f32 %v630, %v669
  %v680 = vmul.f32 %v631, %v671
  %v681 = vmul.f32 %v632, %v673
  %v682 = vmul.f32 %v633, %v675
  %v683 = vlaneseq
  %v684 = vshrl.u32 %v683, 7
  %v685 = vsub.s32 3, %v684
  %v686 = vrot.slane %v104, %v685
  %v688 = vsel %vm208, %v676, 0
  %v691 = vsel %vm208, %v677, 0
  %v694 = vsel %vm208, %v678, 0
  %v697 = vsel %vm208, %v679, 0
  %v700 = vsel %vm208, %v680, 0
  %v703 = vsel %vm208, %v681, 0
  %v706 = vsel %vm208, %v682, 0
  %708 = vmatprep.subr.mxu0 0.0
  %709 = vmatpush1.msra.mxu0 0.0
  %710 = vmatprep.subr.mxu0 0.0
  %711 = vmatpush1.msra.mxu0 0.0
  %712 = vmatprep.subr.mxu0 0.0
  %713 = vmatpush1.msra.mxu0 0.0
  %714 = vmatprep.subr.mxu0 0.0
  %715 = vmatpush1.msra.mxu0 0.0
  %716 = vmatprep.subr.mxu0 0.0
  %717 = vmatpush1.msra.mxu0 0.0
  %718 = vmatprep.subr.mxu0 0.0
  %719 = vmatpush1.msra.mxu0 0.0
  %720 = vmatprep.subr.mxu0 0.0
  %721 = vmatpush1.msra.mxu0 0.0
  %722 = vmatprep.subr.mxu0 0.0
  %723 = vmatpush1.msra.mxu0 0.0
  %724 = vmatprep.subr.mxu0 0.0
  %725 = vmatpush1.msra.mxu0 0.0
  %726 = vmatprep.subr.mxu0 0.0
  %727 = vmatpush1.msra.mxu0 0.0
  %728 = vmatprep.subr.mxu0 0.0
  %729 = vmatpush1.msra.mxu0 0.0
  %730 = vmatprep.subr.mxu0 0.0
  %731 = vmatpush1.msra.mxu0 0.0
  %732 = vmatprep.subr.mxu0 0.0
  %733 = vmatpush1.msra.mxu0 %v63
  %734 = vmatprep.subr.mxu0 0.0
  %735 = vmatpush1.msra.mxu0 %v62
  %736 = vmatprep.subr.mxu0 0.0
  %737 = vmatpush1.msra.mxu0 %v61
  %738 = vmatprep.subr.mxu0 0.0
  %739 = vmatpush1.msra.mxu0 %v60
  %740 = vmatprep.subr.mxu0 0.0
  %741 = vmatpush2.msra.mxu0 0.0
  %742 = vmatprep.subr.mxu0 0.0
  %743 = vmatpush2.msra.mxu0 0.0
  %744 = vmatprep.subr.mxu0 0.0
  %745 = vmatpush2.msra.mxu0 0.0
  %746 = vmatprep.subr.mxu0 0.0
  %747 = vmatpush2.msra.mxu0 0.0
  %748 = vmatprep.subr.mxu0 0.0
  %749 = vmatpush2.msra.mxu0 0.0
  %750 = vmatprep.subr.mxu0 0.0
  %751 = vmatpush2.msra.mxu0 0.0
  %752 = vmatprep.subr.mxu0 0.0
  %753 = vmatpush2.msra.mxu0 0.0
  %754 = vmatprep.subr.mxu0 0.0
  %755 = vmatpush2.msra.mxu0 0.0
  %756 = vmatprep.subr.mxu0 0.0
  %757 = vmatpush2.msra.mxu0 0.0
  %758 = vmatprep.subr.mxu0 0.0
  %759 = vmatpush2.msra.mxu0 0.0
  %760 = vmatprep.subr.mxu0 0.0
  %761 = vmatpush2.msra.mxu0 0.0
  %762 = vmatprep.subr.mxu0 0.0
  %763 = vmatpush2.msra.mxu0 0.0
  %764 = vmatprep.subr.mxu0 0.0
  %765 = vmatpush2.msra.mxu0 0.0
  %766 = vmatprep.subr.mxu0 0.0
  %767 = vmatpush2.msra.mxu0 0.0
  %768 = vmatprep.subr.mxu0 0.0
  %769 = vmatpush2.msra.mxu0 0.0
  %770 = vmatprep.subr.mxu0 0.0
  %771 = vmatpush2.msra.mxu0 0.0
  %772 = vmatprep.mubr.f32.mxu0 0.0
  %773 = vmatmul.mubr.f32.gmra.mxu0 %v688
  %v774 = vpop.f32.mrf.mxu0
  %v775 = vadd.f32 %v686, %v774
  %v776 = vpop.f32.mrf.mxu0
  %777 = vmatprep.mubr.f32.mxu0 0.0
  %778 = vmatmul.mubr.f32.gmra.mxu0 %v691
  %v779 = vpop.f32.mrf.mxu0
  %v780 = vadd.f32 %v686, %v779
  %v781 = vpop.f32.mrf.mxu0
  %782 = vmatprep.mubr.f32.mxu0 0.0
  %783 = vmatmul.mubr.f32.gmra.mxu0 %v694
  %v784 = vpop.f32.mrf.mxu0
  %v785 = vadd.f32 %v686, %v784
  %v786 = vpop.f32.mrf.mxu0
  %787 = vmatprep.mubr.f32.mxu0 0.0
  %788 = vmatmul.mubr.f32.gmra.mxu0 %v697
  %v789 = vpop.f32.mrf.mxu0
  %v790 = vadd.f32 %v686, %v789
  %v791 = vpop.f32.mrf.mxu0
  %792 = vmatprep.mubr.f32.mxu0 0.0
  %793 = vmatmul.mubr.f32.gmra.mxu0 %v700
  %v794 = vpop.f32.mrf.mxu0
  %v795 = vadd.f32 %v686, %v794
  %v796 = vpop.f32.mrf.mxu0
  %797 = vmatprep.mubr.f32.mxu0 0.0
  %798 = vmatmul.mubr.f32.gmra.mxu0 %v703
  %v799 = vpop.f32.mrf.mxu0
  %v800 = vadd.f32 %v686, %v799
  %v801 = vpop.f32.mrf.mxu0
  %802 = vmatprep.mubr.f32.mxu0 0.0
  %803 = vmatmul.mubr.f32.gmra.mxu0 %v706
  %v804 = vpop.f32.mrf.mxu0
  %v805 = vadd.f32 %v686, %v804
  %v806 = vpop.f32.mrf.mxu0
  %807 = vdwg.mxu0
  %v808 = vxor.u32 %v775, 2147483648
  %v809 = vxor.u32 %v780, 2147483648
  %v810 = vxor.u32 %v785, 2147483648
  %v811 = vxor.u32 %v790, 2147483648
  %v812 = vxor.u32 %v795, 2147483648
  %v813 = vxor.u32 %v800, 2147483648
  %v814 = vxor.u32 %v805, 2147483648
  %v815 = vmul.f32 %v808, 1.442695
  %v816 = vpow.pop %v815
  %v817 = vmul.f32 %v809, 1.442695
  %v818 = vpow.pop %v817
  %v819 = vmul.f32 %v810, 1.442695
  %v820 = vpow.pop %v819
  %v821 = vmul.f32 %v811, 1.442695
  %v822 = vpow.pop %v821
  %v823 = vmul.f32 %v812, 1.442695
  %v824 = vpow.pop %v823
  %v825 = vmul.f32 %v813, 1.442695
  %v826 = vpow.pop %v825
  %v827 = vmul.f32 %v814, 1.442695
  %v828 = vpow.pop %v827
  %v829 = vadd.f32 %v816, 1.0
  %v830 = vadd.f32 %v818, 1.0
  %v831 = vadd.f32 %v820, 1.0
  %v832 = vadd.f32 %v822, 1.0
  %v833 = vadd.f32 %v824, 1.0
  %v834 = vadd.f32 %v826, 1.0
  %v835 = vadd.f32 %v828, 1.0
  %v836 = vrcp.pop %v829
  %v837 = vmul.f32 1.0, %v836
  %v838 = vrcp.pop %v830
  %v839 = vmul.f32 1.0, %v838
  %v840 = vrcp.pop %v831
  %v841 = vmul.f32 1.0, %v840
  %v842 = vrcp.pop %v832
  %v843 = vmul.f32 1.0, %v842
  %v844 = vrcp.pop %v833
  %v845 = vmul.f32 1.0, %v844
  %v846 = vrcp.pop %v834
  %v847 = vmul.f32 1.0, %v846
  %v848 = vrcp.pop %v835
  %v849 = vmul.f32 1.0, %v848
  %v850 = vmul.f32 %v775, %v837
  %v851 = vmul.f32 %v780, %v839
  %v852 = vmul.f32 %v785, %v841
  %v853 = vmul.f32 %v790, %v843
  %v854 = vmul.f32 %v795, %v845
  %v855 = vmul.f32 %v800, %v847
  %v856 = vmul.f32 %v805, %v849
  %v857 = vlaneseq
  %v858 = vshrl.u32 %v857, 7
  %v859 = vsub.s32 4, %v858
  %v860 = vrot.slane %v104, %v859
  %v861 = vmul.f32 %v850, %v860
  %v862 = vmul.f32 %v851, %v860
  %v863 = vmul.f32 %v852, %v860
  %v864 = vmul.f32 %v853, %v860
  %v865 = vmul.f32 %v854, %v860
  %v866 = vmul.f32 %v855, %v860
  %v867 = vmul.f32 %v856, %v860
  %v868 = vsel %vm208, %v861, 0.0
  %869 = vadd.xlane.f32.xlu0 %v868
  %v870 = vpop.xlane.xlu0 %869
  %v871 = vsel %vm208, %v862, 0.0
  %872 = vadd.xlane.f32.xlu0 %v871
  %v873 = vpop.xlane.xlu0 %872
  %v874 = vsel %vm208, %v863, 0.0
  %875 = vadd.xlane.f32.xlu0 %v874
  %v876 = vpop.xlane.xlu0 %875
  %v877 = vsel %vm208, %v864, 0.0
  %878 = vadd.xlane.f32.xlu0 %v877
  %v879 = vpop.xlane.xlu0 %878
  %v880 = vsel %vm208, %v865, 0.0
  %881 = vadd.xlane.f32.xlu0 %v880
  %v882 = vpop.xlane.xlu0 %881
  %v883 = vsel %vm208, %v866, 0.0
  %884 = vadd.xlane.f32.xlu0 %v883
  %v885 = vpop.xlane.xlu0 %884
  %v886 = vsel %vm208, %v867, 0.0
  %887 = vadd.xlane.f32.xlu0 %v886
  %v888 = vpop.xlane.xlu0 %887
  %v889 = vlaneseq
  %v890 = vshrl.u32 %v889, 7
  %v891 = vsub.s32 5, %v890
  %v892 = vrot.slane %v104, %v891
  %v893 = vadd.f32 %v870, %v892
  %v894 = vadd.f32 %v873, %v892
  %v895 = vadd.f32 %v876, %v892
  %v896 = vadd.f32 %v879, %v892
  %v897 = vadd.f32 %v882, %v892
  %v898 = vadd.f32 %v885, %v892
  %v899 = vadd.f32 %v888, %v892
  %v900 = vxor.u32 %v893, 2147483648
  %v901 = vxor.u32 %v894, 2147483648
  %v902 = vxor.u32 %v895, 2147483648
  %v903 = vxor.u32 %v896, 2147483648
  %v904 = vxor.u32 %v897, 2147483648
  %v905 = vxor.u32 %v898, 2147483648
  %v906 = vxor.u32 %v899, 2147483648
  %v907 = vmul.f32 %v900, 1.442695
  %v908 = vpow.pop %v907
  %v909 = vmul.f32 %v901, 1.442695
  %v910 = vpow.pop %v909
  %v911 = vmul.f32 %v902, 1.442695
  %v912 = vpow.pop %v911
  %v913 = vmul.f32 %v903, 1.442695
  %v914 = vpow.pop %v913
  %v915 = vmul.f32 %v904, 1.442695
  %v916 = vpow.pop %v915
  %v917 = vmul.f32 %v905, 1.442695
  %v918 = vpow.pop %v917
  %v919 = vmul.f32 %v906, 1.442695
  %v920 = vpow.pop %v919
  %v921 = vadd.f32 %v908, 1.0
  %v922 = vadd.f32 %v910, 1.0
  %v923 = vadd.f32 %v912, 1.0
  %v924 = vadd.f32 %v914, 1.0
  %v925 = vadd.f32 %v916, 1.0
  %v926 = vadd.f32 %v918, 1.0
  %v927 = vadd.f32 %v920, 1.0
  %v928 = vrcp.pop %v921
  %v929 = vmul.f32 1.0, %v928
  %v930 = vrcp.pop %v922
  %v931 = vmul.f32 1.0, %v930
  %v932 = vrcp.pop %v923
  %v933 = vmul.f32 1.0, %v932
  %v934 = vrcp.pop %v924
  %v935 = vmul.f32 1.0, %v934
  %v936 = vrcp.pop %v925
  %v937 = vmul.f32 1.0, %v936
  %v938 = vrcp.pop %v926
  %v939 = vmul.f32 1.0, %v938
  %v940 = vrcp.pop %v927
  %v941 = vmul.f32 1.0, %v940
  %v942 = vmul.f32 %v929, %v49
  %v943 = vmul.f32 %v931, %v50
  %v944 = vmul.f32 %v933, %v51
  %v945 = vmul.f32 %v935, %v52
  %v946 = vmul.f32 %v937, %v53
  %v947 = vmul.f32 %v939, %v54
  %v948 = vmul.f32 %v941, %v55
  %950 = vset.pattern.permute.xlu0 0
  %951 = vperm.xlu0 %950, %v942
  %v952 = vpop.permute.xlu0 %951
  %955 = vset.pattern.permute.xlu0 0
  %956 = vperm.xlu0 %955, %v943
  %v957 = vpop.permute.xlu0 %956
  %960 = vset.pattern.permute.xlu0 0
  %961 = vperm.xlu0 %960, %v944
  %v962 = vpop.permute.xlu0 %961
  %965 = vset.pattern.permute.xlu0 0
  %966 = vperm.xlu0 %965, %v945
  %v967 = vpop.permute.xlu0 %966
  %970 = vset.pattern.permute.xlu0 0
  %971 = vperm.xlu0 %970, %v946
  %v972 = vpop.permute.xlu0 %971
  %975 = vset.pattern.permute.xlu0 0
  %976 = vperm.xlu0 %975, %v947
  %v977 = vpop.permute.xlu0 %976
  %980 = vset.pattern.permute.xlu0 0
  %981 = vperm.xlu0 %980, %v948
  %v982 = vpop.permute.xlu0 %981
  %v984 = vmul.f32 %v850, %v952
  %v985 = vmul.f32 %v851, %v957
  %v986 = vmul.f32 %v852, %v962
  %v987 = vmul.f32 %v853, %v967
  %v988 = vmul.f32 %v854, %v972
  %v989 = vmul.f32 %v855, %v977
  %v990 = vmul.f32 %v856, %v982
  %vm991 = vcmask 457728
  %v993 = vsel %vm991, %v201, 0
  %995 = vmatprep.subr.mxu0 0.0
  %996 = vmatpush1.msra.mxu0 0.0
  %997 = vmatprep.subr.mxu0 0.0
  %998 = vmatpush1.msra.mxu0 0.0
  %999 = vmatprep.subr.mxu0 0.0
  %1000 = vmatpush1.msra.mxu0 0.0
  %1001 = vmatprep.subr.mxu0 0.0
  %1002 = vmatpush1.msra.mxu0 0.0
  %1003 = vmatprep.subr.mxu0 0.0
  %1004 = vmatpush1.msra.mxu0 0.0
  %1005 = vmatprep.subr.mxu0 0.0
  %1006 = vmatpush1.msra.mxu0 0.0
  %1007 = vmatprep.subr.mxu0 0.0
  %1008 = vmatpush1.msra.mxu0 0.0
  %1009 = vmatprep.subr.mxu0 0.0
  %1010 = vmatpush1.msra.mxu0 0.0
  %1011 = vmatprep.subr.mxu0 0.0
  %1012 = vmatpush1.msra.mxu0 0.0
  %1013 = vmatprep.subr.mxu0 0.0
  %1014 = vmatpush1.msra.mxu0 %v990
  %1015 = vmatprep.subr.mxu0 0.0
  %1016 = vmatpush1.msra.mxu0 %v989
  %1017 = vmatprep.subr.mxu0 0.0
  %1018 = vmatpush1.msra.mxu0 %v988
  %1019 = vmatprep.subr.mxu0 0.0
  %1020 = vmatpush1.msra.mxu0 %v987
  %1021 = vmatprep.subr.mxu0 0.0
  %1022 = vmatpush1.msra.mxu0 %v986
  %1023 = vmatprep.subr.mxu0 0.0
  %1024 = vmatpush1.msra.mxu0 %v985
  %1025 = vmatprep.subr.mxu0 0.0
  %1026 = vmatpush1.msra.mxu0 %v984
  %1027 = vmatprep.subr.mxu0 0.0
  %1028 = vmatpush2.msra.mxu0 0.0
  %1029 = vmatprep.subr.mxu0 0.0
  %1030 = vmatpush2.msra.mxu0 0.0
  %1031 = vmatprep.subr.mxu0 0.0
  %1032 = vmatpush2.msra.mxu0 0.0
  %1033 = vmatprep.subr.mxu0 0.0
  %1034 = vmatpush2.msra.mxu0 0.0
  %1035 = vmatprep.subr.mxu0 0.0
  %1036 = vmatpush2.msra.mxu0 0.0
  %1037 = vmatprep.subr.mxu0 0.0
  %1038 = vmatpush2.msra.mxu0 0.0
  %1039 = vmatprep.subr.mxu0 0.0
  %1040 = vmatpush2.msra.mxu0 0.0
  %1041 = vmatprep.subr.mxu0 0.0
  %1042 = vmatpush2.msra.mxu0 0.0
  %1043 = vmatprep.subr.mxu0 0.0
  %1044 = vmatpush2.msra.mxu0 0.0
  %1045 = vmatprep.subr.mxu0 0.0
  %1046 = vmatpush2.msra.mxu0 0.0
  %1047 = vmatprep.subr.mxu0 0.0
  %1048 = vmatpush2.msra.mxu0 0.0
  %1049 = vmatprep.subr.mxu0 0.0
  %1050 = vmatpush2.msra.mxu0 0.0
  %1051 = vmatprep.subr.mxu0 0.0
  %1052 = vmatpush2.msra.mxu0 0.0
  %1053 = vmatprep.subr.mxu0 0.0
  %1054 = vmatpush2.msra.mxu0 0.0
  %1055 = vmatprep.subr.mxu0 0.0
  %1056 = vmatpush2.msra.mxu0 0.0
  %1057 = vmatprep.subr.mxu0 0.0
  %1058 = vmatpush2.msra.mxu0 0.0
  %1059 = vmatprep.mubr.f32.mxu0 0.0
  %1060 = vmatmul.mubr.f32.gmra.mxu0 %v993
  %v1061 = vpop.f32.mrf.mxu0
  %v1062 = vadd.f32 0.0, %v1061
  %v1063 = vpop.f32.mrf.mxu0
  %1064 = vdwg.mxu0
  %v1065 = vmul.f32 %v1062, 0.01
  %1067 = vrot.lane.b32.xlu0 %v1065, 32
  %v1068 = vpop.permute.xlu0 %1067
  %v1070 = vsel %vm208, %v31, %v1068
  %v1071 = vlaneseq
  %v1072 = vshrl.u32 %v1071, 7
  %v1073 = vsub.s32 6, %v1072
  %v1074 = vrot.slane %v104, %v1073
  %vm1075 = vcmask 523264
  %v1077 = vsel %vm1075, %v1070, 0
  %1079 = vmatprep.subr.mxu0 0.0
  %1080 = vmatpush1.msra.mxu0 0.0
  %1081 = vmatprep.subr.mxu0 0.0
  %1082 = vmatpush1.msra.mxu0 0.0
  %1083 = vmatprep.subr.mxu0 0.0
  %1084 = vmatpush1.msra.mxu0 0.0
  %1085 = vmatprep.subr.mxu0 0.0
  %1086 = vmatpush1.msra.mxu0 0.0
  %1087 = vmatprep.subr.mxu0 0.0
  %1088 = vmatpush1.msra.mxu0 0.0
  %1089 = vmatprep.subr.mxu0 0.0
  %1090 = vmatpush1.msra.mxu0 0.0
  %1091 = vmatprep.subr.mxu0 0.0
  %1092 = vmatpush1.msra.mxu0 0.0
  %1093 = vmatprep.subr.mxu0 0.0
  %1094 = vmatpush1.msra.mxu0 0.0
  %1095 = vmatprep.subr.mxu0 0.0
  %1096 = vmatpush1.msra.mxu0 %v71
  %1097 = vmatprep.subr.mxu0 0.0
  %1098 = vmatpush1.msra.mxu0 %v70
  %1099 = vmatprep.subr.mxu0 0.0
  %1100 = vmatpush1.msra.mxu0 %v69
  %1101 = vmatprep.subr.mxu0 0.0
  %1102 = vmatpush1.msra.mxu0 %v68
  %1103 = vmatprep.subr.mxu0 0.0
  %1104 = vmatpush1.msra.mxu0 %v67
  %1105 = vmatprep.subr.mxu0 0.0
  %1106 = vmatpush1.msra.mxu0 %v66
  %1107 = vmatprep.subr.mxu0 0.0
  %1108 = vmatpush1.msra.mxu0 %v65
  %1109 = vmatprep.subr.mxu0 0.0
  %1110 = vmatpush1.msra.mxu0 %v64
  %1111 = vmatprep.subr.mxu0 0.0
  %1112 = vmatpush2.msra.mxu0 0.0
  %1113 = vmatprep.subr.mxu0 0.0
  %1114 = vmatpush2.msra.mxu0 0.0
  %1115 = vmatprep.subr.mxu0 0.0
  %1116 = vmatpush2.msra.mxu0 0.0
  %1117 = vmatprep.subr.mxu0 0.0
  %1118 = vmatpush2.msra.mxu0 0.0
  %1119 = vmatprep.subr.mxu0 0.0
  %1120 = vmatpush2.msra.mxu0 0.0
  %1121 = vmatprep.subr.mxu0 0.0
  %1122 = vmatpush2.msra.mxu0 0.0
  %1123 = vmatprep.subr.mxu0 0.0
  %1124 = vmatpush2.msra.mxu0 0.0
  %1125 = vmatprep.subr.mxu0 0.0
  %1126 = vmatpush2.msra.mxu0 0.0
  %1127 = vmatprep.subr.mxu0 0.0
  %1128 = vmatpush2.msra.mxu0 0.0
  %1129 = vmatprep.subr.mxu0 0.0
  %1130 = vmatpush2.msra.mxu0 0.0
  %1131 = vmatprep.subr.mxu0 0.0
  %1132 = vmatpush2.msra.mxu0 0.0
  %1133 = vmatprep.subr.mxu0 0.0
  %1134 = vmatpush2.msra.mxu0 0.0
  %1135 = vmatprep.subr.mxu0 0.0
  %1136 = vmatpush2.msra.mxu0 0.0
  %1137 = vmatprep.subr.mxu0 0.0
  %1138 = vmatpush2.msra.mxu0 0.0
  %1139 = vmatprep.subr.mxu0 0.0
  %1140 = vmatpush2.msra.mxu0 0.0
  %1141 = vmatprep.subr.mxu0 0.0
  %1142 = vmatpush2.msra.mxu0 0.0
  %1143 = vmatprep.mubr.f32.mxu0 0.0
  %1144 = vmatmul.mubr.f32.gmra.mxu0 %v1077
  %v1145 = vpop.f32.mrf.mxu0
  %v1146 = vadd.f32 %v1074, %v1145
  %v1147 = vpop.f32.mrf.mxu0
  %1148 = vdwg.mxu0
  %v1149 = vxor.u32 %v1146, 2147483648
  %v1150 = vmul.f32 %v1149, 1.442695
  %v1151 = vpow.pop %v1150
  %v1152 = vadd.f32 %v1151, 1.0
  %v1153 = vrcp.pop %v1152
  %v1154 = vmul.f32 1.0, %v1153
  %v1155 = vmul.f32 %v1146, %v1154
  %v1157 = vsel %vm208, %v1155, 0
  %1159 = vmatprep.subr.mxu0 0.0
  %1160 = vmatpush1.msra.mxu0 0.0
  %1161 = vmatprep.subr.mxu0 0.0
  %1162 = vmatpush1.msra.mxu0 0.0
  %1163 = vmatprep.subr.mxu0 0.0
  %1164 = vmatpush1.msra.mxu0 0.0
  %1165 = vmatprep.subr.mxu0 0.0
  %1166 = vmatpush1.msra.mxu0 0.0
  %1167 = vmatprep.subr.mxu0 0.0
  %1168 = vmatpush1.msra.mxu0 0.0
  %1169 = vmatprep.subr.mxu0 0.0
  %1170 = vmatpush1.msra.mxu0 0.0
  %1171 = vmatprep.subr.mxu0 0.0
  %1172 = vmatpush1.msra.mxu0 0.0
  %1173 = vmatprep.subr.mxu0 0.0
  %1174 = vmatpush1.msra.mxu0 0.0
  %1175 = vmatprep.subr.mxu0 0.0
  %1176 = vmatpush1.msra.mxu0 0.0
  %1177 = vmatprep.subr.mxu0 0.0
  %1178 = vmatpush1.msra.mxu0 0.0
  %1179 = vmatprep.subr.mxu0 0.0
  %1180 = vmatpush1.msra.mxu0 0.0
  %1181 = vmatprep.subr.mxu0 0.0
  %1182 = vmatpush1.msra.mxu0 0.0
  %1183 = vmatprep.subr.mxu0 0.0
  %1184 = vmatpush1.msra.mxu0 %v75
  %1185 = vmatprep.subr.mxu0 0.0
  %1186 = vmatpush1.msra.mxu0 %v74
  %1187 = vmatprep.subr.mxu0 0.0
  %1188 = vmatpush1.msra.mxu0 %v73
  %1189 = vmatprep.subr.mxu0 0.0
  %1190 = vmatpush1.msra.mxu0 %v72
  %1191 = vmatprep.subr.mxu0 0.0
  %1192 = vmatpush2.msra.mxu0 0.0
  %1193 = vmatprep.subr.mxu0 0.0
  %1194 = vmatpush2.msra.mxu0 0.0
  %1195 = vmatprep.subr.mxu0 0.0
  %1196 = vmatpush2.msra.mxu0 0.0
  %1197 = vmatprep.subr.mxu0 0.0
  %1198 = vmatpush2.msra.mxu0 0.0
  %1199 = vmatprep.subr.mxu0 0.0
  %1200 = vmatpush2.msra.mxu0 0.0
  %1201 = vmatprep.subr.mxu0 0.0
  %1202 = vmatpush2.msra.mxu0 0.0
  %1203 = vmatprep.subr.mxu0 0.0
  %1204 = vmatpush2.msra.mxu0 0.0
  %1205 = vmatprep.subr.mxu0 0.0
  %1206 = vmatpush2.msra.mxu0 0.0
  %1207 = vmatprep.subr.mxu0 0.0
  %1208 = vmatpush2.msra.mxu0 0.0
  %1209 = vmatprep.subr.mxu0 0.0
  %1210 = vmatpush2.msra.mxu0 0.0
  %1211 = vmatprep.subr.mxu0 0.0
  %1212 = vmatpush2.msra.mxu0 0.0
  %1213 = vmatprep.subr.mxu0 0.0
  %1214 = vmatpush2.msra.mxu0 0.0
  %1215 = vmatprep.subr.mxu0 0.0
  %1216 = vmatpush2.msra.mxu0 0.0
  %1217 = vmatprep.subr.mxu0 0.0
  %1218 = vmatpush2.msra.mxu0 0.0
  %1219 = vmatprep.subr.mxu0 0.0
  %1220 = vmatpush2.msra.mxu0 0.0
  %1221 = vmatprep.subr.mxu0 0.0
  %1222 = vmatpush2.msra.mxu0 0.0
  %1223 = vmatprep.mubr.f32.mxu0 0.0
  %1224 = vmatmul.mubr.f32.gmra.mxu0 %v1157
  %v1225 = vpop.f32.mrf.mxu0
  %v1226 = vadd.f32 0.0, %v1225
  %v1227 = vpop.f32.mrf.mxu0
  %1228 = vdwg.mxu0
  %v1229 = vadd.f32 %v31, %v1226
  %v1230 = vlaneseq
  %v1231 = vshrl.u32 %v1230, 7
  %v1232 = vsub.s32 7, %v1231
  %v1233 = vrot.slane %v104, %v1232
  %v1234 = vadd.f32 %v1229, %v1233
  %v1235 = vmul.f32 %v1234, %v205
  %v1237 = vsel %vm208, %v1235, 0
  %1239 = vmatprep.subr.mxu0 0.0
  %1240 = vmatpush1.msra.mxu0 0.0
  %1241 = vmatprep.subr.mxu0 0.0
  %1242 = vmatpush1.msra.mxu0 0.0
  %1243 = vmatprep.subr.mxu0 0.0
  %1244 = vmatpush1.msra.mxu0 0.0
  %1245 = vmatprep.subr.mxu0 0.0
  %1246 = vmatpush1.msra.mxu0 0.0
  %1247 = vmatprep.subr.mxu0 0.0
  %1248 = vmatpush1.msra.mxu0 0.0
  %1249 = vmatprep.subr.mxu0 0.0
  %1250 = vmatpush1.msra.mxu0 0.0
  %1251 = vmatprep.subr.mxu0 0.0
  %1252 = vmatpush1.msra.mxu0 0.0
  %1253 = vmatprep.subr.mxu0 0.0
  %1254 = vmatpush1.msra.mxu0 0.0
  %1255 = vmatprep.subr.mxu0 0.0
  %1256 = vmatpush1.msra.mxu0 0.0
  %1257 = vmatprep.subr.mxu0 0.0
  %1258 = vmatpush1.msra.mxu0 0.0
  %1259 = vmatprep.subr.mxu0 0.0
  %1260 = vmatpush1.msra.mxu0 0.0
  %1261 = vmatprep.subr.mxu0 0.0
  %1262 = vmatpush1.msra.mxu0 0.0
  %1263 = vmatprep.subr.mxu0 0.0
  %1264 = vmatpush1.msra.mxu0 %v79
  %1265 = vmatprep.subr.mxu0 0.0
  %1266 = vmatpush1.msra.mxu0 %v78
  %1267 = vmatprep.subr.mxu0 0.0
  %1268 = vmatpush1.msra.mxu0 %v77
  %1269 = vmatprep.subr.mxu0 0.0
  %1270 = vmatpush1.msra.mxu0 %v76
  %1271 = vmatprep.subr.mxu0 0.0
  %1272 = vmatpush2.msra.mxu0 0.0
  %1273 = vmatprep.subr.mxu0 0.0
  %1274 = vmatpush2.msra.mxu0 0.0
  %1275 = vmatprep.subr.mxu0 0.0
  %1276 = vmatpush2.msra.mxu0 0.0
  %1277 = vmatprep.subr.mxu0 0.0
  %1278 = vmatpush2.msra.mxu0 0.0
  %1279 = vmatprep.subr.mxu0 0.0
  %1280 = vmatpush2.msra.mxu0 0.0
  %1281 = vmatprep.subr.mxu0 0.0
  %1282 = vmatpush2.msra.mxu0 0.0
  %1283 = vmatprep.subr.mxu0 0.0
  %1284 = vmatpush2.msra.mxu0 0.0
  %1285 = vmatprep.subr.mxu0 0.0
  %1286 = vmatpush2.msra.mxu0 0.0
  %1287 = vmatprep.subr.mxu0 0.0
  %1288 = vmatpush2.msra.mxu0 0.0
  %1289 = vmatprep.subr.mxu0 0.0
  %1290 = vmatpush2.msra.mxu0 0.0
  %1291 = vmatprep.subr.mxu0 0.0
  %1292 = vmatpush2.msra.mxu0 0.0
  %1293 = vmatprep.subr.mxu0 0.0
  %1294 = vmatpush2.msra.mxu0 0.0
  %1295 = vmatprep.subr.mxu0 0.0
  %1296 = vmatpush2.msra.mxu0 0.0
  %1297 = vmatprep.subr.mxu0 0.0
  %1298 = vmatpush2.msra.mxu0 0.0
  %1299 = vmatprep.subr.mxu0 0.0
  %1300 = vmatpush2.msra.mxu0 0.0
  %1301 = vmatprep.subr.mxu0 0.0
  %1302 = vmatpush2.msra.mxu0 0.0
  %1303 = vmatprep.mubr.f32.mxu0 0.0
  %1304 = vmatmul.mubr.f32.gmra.mxu0 %v1237
  %v1305 = vpop.f32.mrf.mxu0
  %v1306 = vadd.f32 0.0, %v1305
  %v1307 = vpop.f32.mrf.mxu0
  %1308 = vdwg.mxu0
  %1310 = vrot.lane.b32.xlu0 %v1306, 96
  %v1311 = vpop.permute.xlu0 %1310
  %v1313 = vlaneseq
  %v1314 = vshrl.u32 %v1313, 7
  %v1315 = vsub.s32 0, %v1314
  %v1316 = vrot.slane %v105, %v1315
  %v1317 = vmul.f32 %v456, %v1316
  %v1318 = vmul.f32 %v459, %v1316
  %v1319 = vmul.f32 %v462, %v1316
  %v1320 = vmul.f32 %v465, %v1316
  %v1321 = vmul.f32 %v468, %v1316
  %v1322 = vmul.f32 %v471, %v1316
  %v1323 = vmul.f32 %v474, %v1316
  %1324 = vmatprep.subr.mxu0 0.0
  %1325 = vmatpush1.msra.mxu0 0.0
  %1326 = vmatprep.subr.mxu0 0.0
  %1327 = vmatpush1.msra.mxu0 0.0
  %1328 = vmatprep.subr.mxu0 0.0
  %1329 = vmatpush1.msra.mxu0 0.0
  %1330 = vmatprep.subr.mxu0 0.0
  %1331 = vmatpush1.msra.mxu0 0.0
  %1332 = vmatprep.subr.mxu0 0.0
  %1333 = vmatpush1.msra.mxu0 0.0
  %1334 = vmatprep.subr.mxu0 0.0
  %1335 = vmatpush1.msra.mxu0 0.0
  %1336 = vmatprep.subr.mxu0 0.0
  %1337 = vmatpush1.msra.mxu0 0.0
  %1338 = vmatprep.subr.mxu0 0.0
  %1339 = vmatpush1.msra.mxu0 0.0
  %1340 = vmatprep.subr.mxu0 0.0
  %1341 = vmatpush1.msra.mxu0 0.0
  %1342 = vmatprep.subr.mxu0 0.0
  %1343 = vmatpush1.msra.mxu0 0.0
  %1344 = vmatprep.subr.mxu0 0.0
  %1345 = vmatpush1.msra.mxu0 0.0
  %1346 = vmatprep.subr.mxu0 0.0
  %1347 = vmatpush1.msra.mxu0 0.0
  %1348 = vmatprep.subr.mxu0 0.0
  %1349 = vmatpush1.msra.mxu0 0.0
  %1350 = vmatprep.subr.mxu0 0.0
  %1351 = vmatpush1.msra.mxu0 0.0
  %1352 = vmatprep.subr.mxu0 0.0
  %1353 = vmatpush1.msra.mxu0 %v1311
  %1354 = vmatprep.subr.mxu0 0.0
  %1355 = vmatpush1.msra.mxu0 %v1306
  %1356 = vmatprep.subr.mxu0 0.0
  %1357 = vmatpush2.msra.mxu0 0.0
  %1358 = vmatprep.subr.mxu0 0.0
  %1359 = vmatpush2.msra.mxu0 0.0
  %1360 = vmatprep.subr.mxu0 0.0
  %1361 = vmatpush2.msra.mxu0 0.0
  %1362 = vmatprep.subr.mxu0 0.0
  %1363 = vmatpush2.msra.mxu0 0.0
  %1364 = vmatprep.subr.mxu0 0.0
  %1365 = vmatpush2.msra.mxu0 0.0
  %1366 = vmatprep.subr.mxu0 0.0
  %1367 = vmatpush2.msra.mxu0 0.0
  %1368 = vmatprep.subr.mxu0 0.0
  %1369 = vmatpush2.msra.mxu0 0.0
  %1370 = vmatprep.subr.mxu0 0.0
  %1371 = vmatpush2.msra.mxu0 0.0
  %1372 = vmatprep.subr.mxu0 0.0
  %1373 = vmatpush2.msra.mxu0 0.0
  %1374 = vmatprep.subr.mxu0 0.0
  %1375 = vmatpush2.msra.mxu0 0.0
  %1376 = vmatprep.subr.mxu0 0.0
  %1377 = vmatpush2.msra.mxu0 0.0
  %1378 = vmatprep.subr.mxu0 0.0
  %1379 = vmatpush2.msra.mxu0 0.0
  %1380 = vmatprep.subr.mxu0 0.0
  %1381 = vmatpush2.msra.mxu0 0.0
  %1382 = vmatprep.subr.mxu0 0.0
  %1383 = vmatpush2.msra.mxu0 0.0
  %1384 = vmatprep.subr.mxu0 0.0
  %1385 = vmatpush2.msra.mxu0 0.0
  %1386 = vmatprep.subr.mxu0 0.0
  %1387 = vmatpush2.msra.mxu0 0.0
  %1388 = vmatprep.mubr.f32.mxu0 0.0
  %1389 = vmatmul.mubr.f32.gmra.mxu0 %v298
  %v1390 = vpop.f32.mrf.mxu0
  %v1391 = vadd.f32 %v1317, %v1390
  %v1392 = vpop.f32.mrf.mxu0
  %1393 = vmatprep.mubr.f32.mxu0 0.0
  %1394 = vmatmul.mubr.f32.gmra.mxu0 %v301
  %v1395 = vpop.f32.mrf.mxu0
  %v1396 = vadd.f32 %v1318, %v1395
  %v1397 = vpop.f32.mrf.mxu0
  %1398 = vmatprep.mubr.f32.mxu0 0.0
  %1399 = vmatmul.mubr.f32.gmra.mxu0 %v304
  %v1400 = vpop.f32.mrf.mxu0
  %v1401 = vadd.f32 %v1319, %v1400
  %v1402 = vpop.f32.mrf.mxu0
  %1403 = vmatprep.mubr.f32.mxu0 0.0
  %1404 = vmatmul.mubr.f32.gmra.mxu0 %v307
  %v1405 = vpop.f32.mrf.mxu0
  %v1406 = vadd.f32 %v1320, %v1405
  %v1407 = vpop.f32.mrf.mxu0
  %1408 = vmatprep.mubr.f32.mxu0 0.0
  %1409 = vmatmul.mubr.f32.gmra.mxu0 %v310
  %v1410 = vpop.f32.mrf.mxu0
  %v1411 = vadd.f32 %v1321, %v1410
  %v1412 = vpop.f32.mrf.mxu0
  %1413 = vmatprep.mubr.f32.mxu0 0.0
  %1414 = vmatmul.mubr.f32.gmra.mxu0 %v313
  %v1415 = vpop.f32.mrf.mxu0
  %v1416 = vadd.f32 %v1322, %v1415
  %v1417 = vpop.f32.mrf.mxu0
  %1418 = vmatprep.mubr.f32.mxu0 0.0
  %1419 = vmatmul.mubr.f32.gmra.mxu0 %v316
  %v1420 = vpop.f32.mrf.mxu0
  %v1421 = vadd.f32 %v1323, %v1420
  %v1422 = vpop.f32.mrf.mxu0
  %1423 = vdwg.mxu0
  %v1424 = vlaneseq
  %v1425 = vshrl.u32 %v1424, 7
  %v1426 = vsub.s32 1, %v1425
  %v1427 = vrot.slane %v105, %v1426
  %v1428 = vmul.f32 %v573, %v1427
  %v1429 = vmul.f32 %v578, %v1427
  %v1430 = vmul.f32 %v583, %v1427
  %v1431 = vmul.f32 %v588, %v1427
  %v1432 = vmul.f32 %v593, %v1427
  %v1433 = vmul.f32 %v598, %v1427
  %v1434 = vmul.f32 %v603, %v1427
  %v1435 = vadd.f32 %v1391, %v1428
  %v1436 = vadd.f32 %v1396, %v1429
  %v1437 = vadd.f32 %v1401, %v1430
  %v1438 = vadd.f32 %v1406, %v1431
  %v1439 = vadd.f32 %v1411, %v1432
  %v1440 = vadd.f32 %v1416, %v1433
  %v1441 = vadd.f32 %v1421, %v1434
  %v1442 = vlaneseq
  %v1443 = vshrl.u32 %v1442, 7
  %v1444 = vsub.s32 2, %v1443
  %v1445 = vrot.slane %v105, %v1444
  %v1446 = vadd.f32 %v1435, %v1445
  %v1447 = vadd.f32 %v1436, %v1445
  %v1448 = vadd.f32 %v1437, %v1445
  %v1449 = vadd.f32 %v1438, %v1445
  %v1450 = vadd.f32 %v1439, %v1445
  %v1451 = vadd.f32 %v1440, %v1445
  %v1452 = vadd.f32 %v1441, %v1445
  %v1453 = vxor.u32 %v1446, 2147483648
  %v1454 = vxor.u32 %v1447, 2147483648
  %v1455 = vxor.u32 %v1448, 2147483648
  %v1456 = vxor.u32 %v1449, 2147483648
  %v1457 = vxor.u32 %v1450, 2147483648
  %v1458 = vxor.u32 %v1451, 2147483648
  %v1459 = vxor.u32 %v1452, 2147483648
  %v1460 = vmul.f32 %v1453, 1.442695
  %v1461 = vpow.pop %v1460
  %v1462 = vmul.f32 %v1454, 1.442695
  %v1463 = vpow.pop %v1462
  %v1464 = vmul.f32 %v1455, 1.442695
  %v1465 = vpow.pop %v1464
  %v1466 = vmul.f32 %v1456, 1.442695
  %v1467 = vpow.pop %v1466
  %v1468 = vmul.f32 %v1457, 1.442695
  %v1469 = vpow.pop %v1468
  %v1470 = vmul.f32 %v1458, 1.442695
  %v1471 = vpow.pop %v1470
  %v1472 = vmul.f32 %v1459, 1.442695
  %v1473 = vpow.pop %v1472
  %v1474 = vadd.f32 %v1461, 1.0
  %v1475 = vadd.f32 %v1463, 1.0
  %v1476 = vadd.f32 %v1465, 1.0
  %v1477 = vadd.f32 %v1467, 1.0
  %v1478 = vadd.f32 %v1469, 1.0
  %v1479 = vadd.f32 %v1471, 1.0
  %v1480 = vadd.f32 %v1473, 1.0
  %v1481 = vrcp.pop %v1474
  %v1482 = vmul.f32 1.0, %v1481
  %v1483 = vrcp.pop %v1475
  %v1484 = vmul.f32 1.0, %v1483
  %v1485 = vrcp.pop %v1476
  %v1486 = vmul.f32 1.0, %v1485
  %v1487 = vrcp.pop %v1477
  %v1488 = vmul.f32 1.0, %v1487
  %v1489 = vrcp.pop %v1478
  %v1490 = vmul.f32 1.0, %v1489
  %v1491 = vrcp.pop %v1479
  %v1492 = vmul.f32 1.0, %v1491
  %v1493 = vrcp.pop %v1480
  %v1494 = vmul.f32 1.0, %v1493
  %v1495 = vmul.f32 %v1446, %v1482
  %v1496 = vmul.f32 %v1447, %v1484
  %v1497 = vmul.f32 %v1448, %v1486
  %v1498 = vmul.f32 %v1449, %v1488
  %v1499 = vmul.f32 %v1450, %v1490
  %v1500 = vmul.f32 %v1451, %v1492
  %v1501 = vmul.f32 %v1452, %v1494
  %v1502 = vlaneseq
  %v1503 = vshrl.u32 %v1502, 7
  %v1504 = vsub.s32 3, %v1503
  %v1505 = vrot.slane %v105, %v1504
  %v1507 = vsel %vm208, %v1495, 0
  %v1510 = vsel %vm208, %v1496, 0
  %v1513 = vsel %vm208, %v1497, 0
  %v1516 = vsel %vm208, %v1498, 0
  %v1519 = vsel %vm208, %v1499, 0
  %v1522 = vsel %vm208, %v1500, 0
  %v1525 = vsel %vm208, %v1501, 0
  %1527 = vmatprep.subr.mxu0 0.0
  %1528 = vmatpush1.msra.mxu0 0.0
  %1529 = vmatprep.subr.mxu0 0.0
  %1530 = vmatpush1.msra.mxu0 0.0
  %1531 = vmatprep.subr.mxu0 0.0
  %1532 = vmatpush1.msra.mxu0 0.0
  %1533 = vmatprep.subr.mxu0 0.0
  %1534 = vmatpush1.msra.mxu0 0.0
  %1535 = vmatprep.subr.mxu0 0.0
  %1536 = vmatpush1.msra.mxu0 0.0
  %1537 = vmatprep.subr.mxu0 0.0
  %1538 = vmatpush1.msra.mxu0 0.0
  %1539 = vmatprep.subr.mxu0 0.0
  %1540 = vmatpush1.msra.mxu0 0.0
  %1541 = vmatprep.subr.mxu0 0.0
  %1542 = vmatpush1.msra.mxu0 0.0
  %1543 = vmatprep.subr.mxu0 0.0
  %1544 = vmatpush1.msra.mxu0 0.0
  %1545 = vmatprep.subr.mxu0 0.0
  %1546 = vmatpush1.msra.mxu0 0.0
  %1547 = vmatprep.subr.mxu0 0.0
  %1548 = vmatpush1.msra.mxu0 0.0
  %1549 = vmatprep.subr.mxu0 0.0
  %1550 = vmatpush1.msra.mxu0 0.0
  %1551 = vmatprep.subr.mxu0 0.0
  %1552 = vmatpush1.msra.mxu0 %v83
  %1553 = vmatprep.subr.mxu0 0.0
  %1554 = vmatpush1.msra.mxu0 %v82
  %1555 = vmatprep.subr.mxu0 0.0
  %1556 = vmatpush1.msra.mxu0 %v81
  %1557 = vmatprep.subr.mxu0 0.0
  %1558 = vmatpush1.msra.mxu0 %v80
  %1559 = vmatprep.subr.mxu0 0.0
  %1560 = vmatpush2.msra.mxu0 0.0
  %1561 = vmatprep.subr.mxu0 0.0
  %1562 = vmatpush2.msra.mxu0 0.0
  %1563 = vmatprep.subr.mxu0 0.0
  %1564 = vmatpush2.msra.mxu0 0.0
  %1565 = vmatprep.subr.mxu0 0.0
  %1566 = vmatpush2.msra.mxu0 0.0
  %1567 = vmatprep.subr.mxu0 0.0
  %1568 = vmatpush2.msra.mxu0 0.0
  %1569 = vmatprep.subr.mxu0 0.0
  %1570 = vmatpush2.msra.mxu0 0.0
  %1571 = vmatprep.subr.mxu0 0.0
  %1572 = vmatpush2.msra.mxu0 0.0
  %1573 = vmatprep.subr.mxu0 0.0
  %1574 = vmatpush2.msra.mxu0 0.0
  %1575 = vmatprep.subr.mxu0 0.0
  %1576 = vmatpush2.msra.mxu0 0.0
  %1577 = vmatprep.subr.mxu0 0.0
  %1578 = vmatpush2.msra.mxu0 0.0
  %1579 = vmatprep.subr.mxu0 0.0
  %1580 = vmatpush2.msra.mxu0 0.0
  %1581 = vmatprep.subr.mxu0 0.0
  %1582 = vmatpush2.msra.mxu0 0.0
  %1583 = vmatprep.subr.mxu0 0.0
  %1584 = vmatpush2.msra.mxu0 0.0
  %1585 = vmatprep.subr.mxu0 0.0
  %1586 = vmatpush2.msra.mxu0 0.0
  %1587 = vmatprep.subr.mxu0 0.0
  %1588 = vmatpush2.msra.mxu0 0.0
  %1589 = vmatprep.subr.mxu0 0.0
  %1590 = vmatpush2.msra.mxu0 0.0
  %1591 = vmatprep.mubr.f32.mxu0 0.0
  %1592 = vmatmul.mubr.f32.gmra.mxu0 %v1507
  %v1593 = vpop.f32.mrf.mxu0
  %v1594 = vadd.f32 %v1505, %v1593
  %v1595 = vpop.f32.mrf.mxu0
  %1596 = vmatprep.mubr.f32.mxu0 0.0
  %1597 = vmatmul.mubr.f32.gmra.mxu0 %v1510
  %v1598 = vpop.f32.mrf.mxu0
  %v1599 = vadd.f32 %v1505, %v1598
  %v1600 = vpop.f32.mrf.mxu0
  %1601 = vmatprep.mubr.f32.mxu0 0.0
  %1602 = vmatmul.mubr.f32.gmra.mxu0 %v1513
  %v1603 = vpop.f32.mrf.mxu0
  %v1604 = vadd.f32 %v1505, %v1603
  %v1605 = vpop.f32.mrf.mxu0
  %1606 = vmatprep.mubr.f32.mxu0 0.0
  %1607 = vmatmul.mubr.f32.gmra.mxu0 %v1516
  %v1608 = vpop.f32.mrf.mxu0
  %v1609 = vadd.f32 %v1505, %v1608
  %v1610 = vpop.f32.mrf.mxu0
  %1611 = vmatprep.mubr.f32.mxu0 0.0
  %1612 = vmatmul.mubr.f32.gmra.mxu0 %v1519
  %v1613 = vpop.f32.mrf.mxu0
  %v1614 = vadd.f32 %v1505, %v1613
  %v1615 = vpop.f32.mrf.mxu0
  %1616 = vmatprep.mubr.f32.mxu0 0.0
  %1617 = vmatmul.mubr.f32.gmra.mxu0 %v1522
  %v1618 = vpop.f32.mrf.mxu0
  %v1619 = vadd.f32 %v1505, %v1618
  %v1620 = vpop.f32.mrf.mxu0
  %1621 = vmatprep.mubr.f32.mxu0 0.0
  %1622 = vmatmul.mubr.f32.gmra.mxu0 %v1525
  %v1623 = vpop.f32.mrf.mxu0
  %v1624 = vadd.f32 %v1505, %v1623
  %v1625 = vpop.f32.mrf.mxu0
  %1626 = vdwg.mxu0
  %v1627 = vxor.u32 %v1594, 2147483648
  %v1628 = vxor.u32 %v1599, 2147483648
  %v1629 = vxor.u32 %v1604, 2147483648
  %v1630 = vxor.u32 %v1609, 2147483648
  %v1631 = vxor.u32 %v1614, 2147483648
  %v1632 = vxor.u32 %v1619, 2147483648
  %v1633 = vxor.u32 %v1624, 2147483648
  %v1634 = vmul.f32 %v1627, 1.442695
  %v1635 = vpow.pop %v1634
  %v1636 = vmul.f32 %v1628, 1.442695
  %v1637 = vpow.pop %v1636
  %v1638 = vmul.f32 %v1629, 1.442695
  %v1639 = vpow.pop %v1638
  %v1640 = vmul.f32 %v1630, 1.442695
  %v1641 = vpow.pop %v1640
  %v1642 = vmul.f32 %v1631, 1.442695
  %v1643 = vpow.pop %v1642
  %v1644 = vmul.f32 %v1632, 1.442695
  %v1645 = vpow.pop %v1644
  %v1646 = vmul.f32 %v1633, 1.442695
  %v1647 = vpow.pop %v1646
  %v1648 = vadd.f32 %v1635, 1.0
  %v1649 = vadd.f32 %v1637, 1.0
  %v1650 = vadd.f32 %v1639, 1.0
  %v1651 = vadd.f32 %v1641, 1.0
  %v1652 = vadd.f32 %v1643, 1.0
  %v1653 = vadd.f32 %v1645, 1.0
  %v1654 = vadd.f32 %v1647, 1.0
  %v1655 = vrcp.pop %v1648
  %v1656 = vmul.f32 1.0, %v1655
  %v1657 = vrcp.pop %v1649
  %v1658 = vmul.f32 1.0, %v1657
  %v1659 = vrcp.pop %v1650
  %v1660 = vmul.f32 1.0, %v1659
  %v1661 = vrcp.pop %v1651
  %v1662 = vmul.f32 1.0, %v1661
  %v1663 = vrcp.pop %v1652
  %v1664 = vmul.f32 1.0, %v1663
  %v1665 = vrcp.pop %v1653
  %v1666 = vmul.f32 1.0, %v1665
  %v1667 = vrcp.pop %v1654
  %v1668 = vmul.f32 1.0, %v1667
  %v1669 = vmul.f32 %v1594, %v1656
  %v1670 = vmul.f32 %v1599, %v1658
  %v1671 = vmul.f32 %v1604, %v1660
  %v1672 = vmul.f32 %v1609, %v1662
  %v1673 = vmul.f32 %v1614, %v1664
  %v1674 = vmul.f32 %v1619, %v1666
  %v1675 = vmul.f32 %v1624, %v1668
  %v1676 = vlaneseq
  %v1677 = vshrl.u32 %v1676, 7
  %v1678 = vsub.s32 4, %v1677
  %v1679 = vrot.slane %v105, %v1678
  %v1680 = vmul.f32 %v1669, %v1679
  %v1681 = vmul.f32 %v1670, %v1679
  %v1682 = vmul.f32 %v1671, %v1679
  %v1683 = vmul.f32 %v1672, %v1679
  %v1684 = vmul.f32 %v1673, %v1679
  %v1685 = vmul.f32 %v1674, %v1679
  %v1686 = vmul.f32 %v1675, %v1679
  %v1687 = vsel %vm208, %v1680, 0.0
  %1688 = vadd.xlane.f32.xlu0 %v1687
  %v1689 = vpop.xlane.xlu0 %1688
  %v1690 = vsel %vm208, %v1681, 0.0
  %1691 = vadd.xlane.f32.xlu0 %v1690
  %v1692 = vpop.xlane.xlu0 %1691
  %v1693 = vsel %vm208, %v1682, 0.0
  %1694 = vadd.xlane.f32.xlu0 %v1693
  %v1695 = vpop.xlane.xlu0 %1694
  %v1696 = vsel %vm208, %v1683, 0.0
  %1697 = vadd.xlane.f32.xlu0 %v1696
  %v1698 = vpop.xlane.xlu0 %1697
  %v1699 = vsel %vm208, %v1684, 0.0
  %1700 = vadd.xlane.f32.xlu0 %v1699
  %v1701 = vpop.xlane.xlu0 %1700
  %v1702 = vsel %vm208, %v1685, 0.0
  %1703 = vadd.xlane.f32.xlu0 %v1702
  %v1704 = vpop.xlane.xlu0 %1703
  %v1705 = vsel %vm208, %v1686, 0.0
  %1706 = vadd.xlane.f32.xlu0 %v1705
  %v1707 = vpop.xlane.xlu0 %1706
  %v1708 = vlaneseq
  %v1709 = vshrl.u32 %v1708, 7
  %v1710 = vsub.s32 5, %v1709
  %v1711 = vrot.slane %v105, %v1710
  %v1712 = vadd.f32 %v1689, %v1711
  %v1713 = vadd.f32 %v1692, %v1711
  %v1714 = vadd.f32 %v1695, %v1711
  %v1715 = vadd.f32 %v1698, %v1711
  %v1716 = vadd.f32 %v1701, %v1711
  %v1717 = vadd.f32 %v1704, %v1711
  %v1718 = vadd.f32 %v1707, %v1711
  %v1719 = vxor.u32 %v1712, 2147483648
  %v1720 = vxor.u32 %v1713, 2147483648
  %v1721 = vxor.u32 %v1714, 2147483648
  %v1722 = vxor.u32 %v1715, 2147483648
  %v1723 = vxor.u32 %v1716, 2147483648
  %v1724 = vxor.u32 %v1717, 2147483648
  %v1725 = vxor.u32 %v1718, 2147483648
  %v1726 = vmul.f32 %v1719, 1.442695
  %v1727 = vpow.pop %v1726
  %v1728 = vmul.f32 %v1720, 1.442695
  %v1729 = vpow.pop %v1728
  %v1730 = vmul.f32 %v1721, 1.442695
  %v1731 = vpow.pop %v1730
  %v1732 = vmul.f32 %v1722, 1.442695
  %v1733 = vpow.pop %v1732
  %v1734 = vmul.f32 %v1723, 1.442695
  %v1735 = vpow.pop %v1734
  %v1736 = vmul.f32 %v1724, 1.442695
  %v1737 = vpow.pop %v1736
  %v1738 = vmul.f32 %v1725, 1.442695
  %v1739 = vpow.pop %v1738
  %v1740 = vadd.f32 %v1727, 1.0
  %v1741 = vadd.f32 %v1729, 1.0
  %v1742 = vadd.f32 %v1731, 1.0
  %v1743 = vadd.f32 %v1733, 1.0
  %v1744 = vadd.f32 %v1735, 1.0
  %v1745 = vadd.f32 %v1737, 1.0
  %v1746 = vadd.f32 %v1739, 1.0
  %v1747 = vrcp.pop %v1740
  %v1748 = vmul.f32 1.0, %v1747
  %v1749 = vrcp.pop %v1741
  %v1750 = vmul.f32 1.0, %v1749
  %v1751 = vrcp.pop %v1742
  %v1752 = vmul.f32 1.0, %v1751
  %v1753 = vrcp.pop %v1743
  %v1754 = vmul.f32 1.0, %v1753
  %v1755 = vrcp.pop %v1744
  %v1756 = vmul.f32 1.0, %v1755
  %v1757 = vrcp.pop %v1745
  %v1758 = vmul.f32 1.0, %v1757
  %v1759 = vrcp.pop %v1746
  %v1760 = vmul.f32 1.0, %v1759
  %v1761 = vmul.f32 %v1748, %v49
  %v1762 = vmul.f32 %v1750, %v50
  %v1763 = vmul.f32 %v1752, %v51
  %v1764 = vmul.f32 %v1754, %v52
  %v1765 = vmul.f32 %v1756, %v53
  %v1766 = vmul.f32 %v1758, %v54
  %v1767 = vmul.f32 %v1760, %v55
  %1769 = vset.pattern.permute.xlu0 0
  %1770 = vperm.xlu0 %1769, %v1761
  %v1771 = vpop.permute.xlu0 %1770
  %1774 = vset.pattern.permute.xlu0 0
  %1775 = vperm.xlu0 %1774, %v1762
  %v1776 = vpop.permute.xlu0 %1775
  %1779 = vset.pattern.permute.xlu0 0
  %1780 = vperm.xlu0 %1779, %v1763
  %v1781 = vpop.permute.xlu0 %1780
  %1784 = vset.pattern.permute.xlu0 0
  %1785 = vperm.xlu0 %1784, %v1764
  %v1786 = vpop.permute.xlu0 %1785
  %1789 = vset.pattern.permute.xlu0 0
  %1790 = vperm.xlu0 %1789, %v1765
  %v1791 = vpop.permute.xlu0 %1790
  %1794 = vset.pattern.permute.xlu0 0
  %1795 = vperm.xlu0 %1794, %v1766
  %v1796 = vpop.permute.xlu0 %1795
  %1799 = vset.pattern.permute.xlu0 0
  %1800 = vperm.xlu0 %1799, %v1767
  %v1801 = vpop.permute.xlu0 %1800
  %v1803 = vmul.f32 %v1669, %v1771
  %v1804 = vmul.f32 %v1670, %v1776
  %v1805 = vmul.f32 %v1671, %v1781
  %v1806 = vmul.f32 %v1672, %v1786
  %v1807 = vmul.f32 %v1673, %v1791
  %v1808 = vmul.f32 %v1674, %v1796
  %v1809 = vmul.f32 %v1675, %v1801
  %1810 = vmatprep.subr.mxu0 0.0
  %1811 = vmatpush1.msra.mxu0 0.0
  %1812 = vmatprep.subr.mxu0 0.0
  %1813 = vmatpush1.msra.mxu0 0.0
  %1814 = vmatprep.subr.mxu0 0.0
  %1815 = vmatpush1.msra.mxu0 0.0
  %1816 = vmatprep.subr.mxu0 0.0
  %1817 = vmatpush1.msra.mxu0 0.0
  %1818 = vmatprep.subr.mxu0 0.0
  %1819 = vmatpush1.msra.mxu0 0.0
  %1820 = vmatprep.subr.mxu0 0.0
  %1821 = vmatpush1.msra.mxu0 0.0
  %1822 = vmatprep.subr.mxu0 0.0
  %1823 = vmatpush1.msra.mxu0 0.0
  %1824 = vmatprep.subr.mxu0 0.0
  %1825 = vmatpush1.msra.mxu0 0.0
  %1826 = vmatprep.subr.mxu0 0.0
  %1827 = vmatpush1.msra.mxu0 0.0
  %1828 = vmatprep.subr.mxu0 0.0
  %1829 = vmatpush1.msra.mxu0 %v1809
  %1830 = vmatprep.subr.mxu0 0.0
  %1831 = vmatpush1.msra.mxu0 %v1808
  %1832 = vmatprep.subr.mxu0 0.0
  %1833 = vmatpush1.msra.mxu0 %v1807
  %1834 = vmatprep.subr.mxu0 0.0
  %1835 = vmatpush1.msra.mxu0 %v1806
  %1836 = vmatprep.subr.mxu0 0.0
  %1837 = vmatpush1.msra.mxu0 %v1805
  %1838 = vmatprep.subr.mxu0 0.0
  %1839 = vmatpush1.msra.mxu0 %v1804
  %1840 = vmatprep.subr.mxu0 0.0
  %1841 = vmatpush1.msra.mxu0 %v1803
  %1842 = vmatprep.subr.mxu0 0.0
  %1843 = vmatpush2.msra.mxu0 0.0
  %1844 = vmatprep.subr.mxu0 0.0
  %1845 = vmatpush2.msra.mxu0 0.0
  %1846 = vmatprep.subr.mxu0 0.0
  %1847 = vmatpush2.msra.mxu0 0.0
  %1848 = vmatprep.subr.mxu0 0.0
  %1849 = vmatpush2.msra.mxu0 0.0
  %1850 = vmatprep.subr.mxu0 0.0
  %1851 = vmatpush2.msra.mxu0 0.0
  %1852 = vmatprep.subr.mxu0 0.0
  %1853 = vmatpush2.msra.mxu0 0.0
  %1854 = vmatprep.subr.mxu0 0.0
  %1855 = vmatpush2.msra.mxu0 0.0
  %1856 = vmatprep.subr.mxu0 0.0
  %1857 = vmatpush2.msra.mxu0 0.0
  %1858 = vmatprep.subr.mxu0 0.0
  %1859 = vmatpush2.msra.mxu0 0.0
  %1860 = vmatprep.subr.mxu0 0.0
  %1861 = vmatpush2.msra.mxu0 0.0
  %1862 = vmatprep.subr.mxu0 0.0
  %1863 = vmatpush2.msra.mxu0 0.0
  %1864 = vmatprep.subr.mxu0 0.0
  %1865 = vmatpush2.msra.mxu0 0.0
  %1866 = vmatprep.subr.mxu0 0.0
  %1867 = vmatpush2.msra.mxu0 0.0
  %1868 = vmatprep.subr.mxu0 0.0
  %1869 = vmatpush2.msra.mxu0 0.0
  %1870 = vmatprep.subr.mxu0 0.0
  %1871 = vmatpush2.msra.mxu0 0.0
  %1872 = vmatprep.subr.mxu0 0.0
  %1873 = vmatpush2.msra.mxu0 0.0
  %1874 = vmatprep.mubr.f32.mxu0 0.0
  %1875 = vmatmul.mubr.f32.gmra.mxu0 %v993
  %v1876 = vpop.f32.mrf.mxu0
  %v1877 = vadd.f32 0.0, %v1876
  %v1878 = vpop.f32.mrf.mxu0
  %1879 = vdwg.mxu0
  %v1880 = vmul.f32 %v1877, 0.01
  %1882 = vrot.lane.b32.xlu0 %v1880, 32
  %v1883 = vpop.permute.xlu0 %1882
  %v1885 = vsel %vm208, %v1235, %v1883
  %v1886 = vlaneseq
  %v1887 = vshrl.u32 %v1886, 7
  %v1888 = vsub.s32 6, %v1887
  %v1889 = vrot.slane %v105, %v1888
  %v1891 = vsel %vm1075, %v1885, 0
  %1893 = vmatprep.subr.mxu0 0.0
  %1894 = vmatpush1.msra.mxu0 0.0
  %1895 = vmatprep.subr.mxu0 0.0
  %1896 = vmatpush1.msra.mxu0 0.0
  %1897 = vmatprep.subr.mxu0 0.0
  %1898 = vmatpush1.msra.mxu0 0.0
  %1899 = vmatprep.subr.mxu0 0.0
  %1900 = vmatpush1.msra.mxu0 0.0
  %1901 = vmatprep.subr.mxu0 0.0
  %1902 = vmatpush1.msra.mxu0 0.0
  %1903 = vmatprep.subr.mxu0 0.0
  %1904 = vmatpush1.msra.mxu0 0.0
  %1905 = vmatprep.subr.mxu0 0.0
  %1906 = vmatpush1.msra.mxu0 0.0
  %1907 = vmatprep.subr.mxu0 0.0
  %1908 = vmatpush1.msra.mxu0 0.0
  %1909 = vmatprep.subr.mxu0 0.0
  %1910 = vmatpush1.msra.mxu0 %v91
  %1911 = vmatprep.subr.mxu0 0.0
  %1912 = vmatpush1.msra.mxu0 %v90
  %1913 = vmatprep.subr.mxu0 0.0
  %1914 = vmatpush1.msra.mxu0 %v89
  %1915 = vmatprep.subr.mxu0 0.0
  %1916 = vmatpush1.msra.mxu0 %v88
  %1917 = vmatprep.subr.mxu0 0.0
  %1918 = vmatpush1.msra.mxu0 %v87
  %1919 = vmatprep.subr.mxu0 0.0
  %1920 = vmatpush1.msra.mxu0 %v86
  %1921 = vmatprep.subr.mxu0 0.0
  %1922 = vmatpush1.msra.mxu0 %v85
  %1923 = vmatprep.subr.mxu0 0.0
  %1924 = vmatpush1.msra.mxu0 %v84
  %1925 = vmatprep.subr.mxu0 0.0
  %1926 = vmatpush2.msra.mxu0 0.0
  %1927 = vmatprep.subr.mxu0 0.0
  %1928 = vmatpush2.msra.mxu0 0.0
  %1929 = vmatprep.subr.mxu0 0.0
  %1930 = vmatpush2.msra.mxu0 0.0
  %1931 = vmatprep.subr.mxu0 0.0
  %1932 = vmatpush2.msra.mxu0 0.0
  %1933 = vmatprep.subr.mxu0 0.0
  %1934 = vmatpush2.msra.mxu0 0.0
  %1935 = vmatprep.subr.mxu0 0.0
  %1936 = vmatpush2.msra.mxu0 0.0
  %1937 = vmatprep.subr.mxu0 0.0
  %1938 = vmatpush2.msra.mxu0 0.0
  %1939 = vmatprep.subr.mxu0 0.0
  %1940 = vmatpush2.msra.mxu0 0.0
  %1941 = vmatprep.subr.mxu0 0.0
  %1942 = vmatpush2.msra.mxu0 0.0
  %1943 = vmatprep.subr.mxu0 0.0
  %1944 = vmatpush2.msra.mxu0 0.0
  %1945 = vmatprep.subr.mxu0 0.0
  %1946 = vmatpush2.msra.mxu0 0.0
  %1947 = vmatprep.subr.mxu0 0.0
  %1948 = vmatpush2.msra.mxu0 0.0
  %1949 = vmatprep.subr.mxu0 0.0
  %1950 = vmatpush2.msra.mxu0 0.0
  %1951 = vmatprep.subr.mxu0 0.0
  %1952 = vmatpush2.msra.mxu0 0.0
  %1953 = vmatprep.subr.mxu0 0.0
  %1954 = vmatpush2.msra.mxu0 0.0
  %1955 = vmatprep.subr.mxu0 0.0
  %1956 = vmatpush2.msra.mxu0 0.0
  %1957 = vmatprep.mubr.f32.mxu0 0.0
  %1958 = vmatmul.mubr.f32.gmra.mxu0 %v1891
  %v1959 = vpop.f32.mrf.mxu0
  %v1960 = vadd.f32 %v1889, %v1959
  %v1961 = vpop.f32.mrf.mxu0
  %1962 = vdwg.mxu0
  %v1963 = vxor.u32 %v1960, 2147483648
  %v1964 = vmul.f32 %v1963, 1.442695
  %v1965 = vpow.pop %v1964
  %v1966 = vadd.f32 %v1965, 1.0
  %v1967 = vrcp.pop %v1966
  %v1968 = vmul.f32 1.0, %v1967
  %v1969 = vmul.f32 %v1960, %v1968
  %v1971 = vsel %vm208, %v1969, 0
  %1973 = vmatprep.subr.mxu0 0.0
  %1974 = vmatpush1.msra.mxu0 0.0
  %1975 = vmatprep.subr.mxu0 0.0
  %1976 = vmatpush1.msra.mxu0 0.0
  %1977 = vmatprep.subr.mxu0 0.0
  %1978 = vmatpush1.msra.mxu0 0.0
  %1979 = vmatprep.subr.mxu0 0.0
  %1980 = vmatpush1.msra.mxu0 0.0
  %1981 = vmatprep.subr.mxu0 0.0
  %1982 = vmatpush1.msra.mxu0 0.0
  %1983 = vmatprep.subr.mxu0 0.0
  %1984 = vmatpush1.msra.mxu0 0.0
  %1985 = vmatprep.subr.mxu0 0.0
  %1986 = vmatpush1.msra.mxu0 0.0
  %1987 = vmatprep.subr.mxu0 0.0
  %1988 = vmatpush1.msra.mxu0 0.0
  %1989 = vmatprep.subr.mxu0 0.0
  %1990 = vmatpush1.msra.mxu0 0.0
  %1991 = vmatprep.subr.mxu0 0.0
  %1992 = vmatpush1.msra.mxu0 0.0
  %1993 = vmatprep.subr.mxu0 0.0
  %1994 = vmatpush1.msra.mxu0 0.0
  %1995 = vmatprep.subr.mxu0 0.0
  %1996 = vmatpush1.msra.mxu0 0.0
  %1997 = vmatprep.subr.mxu0 0.0
  %1998 = vmatpush1.msra.mxu0 %v95
  %1999 = vmatprep.subr.mxu0 0.0
  %2000 = vmatpush1.msra.mxu0 %v94
  %2001 = vmatprep.subr.mxu0 0.0
  %2002 = vmatpush1.msra.mxu0 %v93
  %2003 = vmatprep.subr.mxu0 0.0
  %2004 = vmatpush1.msra.mxu0 %v92
  %2005 = vmatprep.subr.mxu0 0.0
  %2006 = vmatpush2.msra.mxu0 0.0
  %2007 = vmatprep.subr.mxu0 0.0
  %2008 = vmatpush2.msra.mxu0 0.0
  %2009 = vmatprep.subr.mxu0 0.0
  %2010 = vmatpush2.msra.mxu0 0.0
  %2011 = vmatprep.subr.mxu0 0.0
  %2012 = vmatpush2.msra.mxu0 0.0
  %2013 = vmatprep.subr.mxu0 0.0
  %2014 = vmatpush2.msra.mxu0 0.0
  %2015 = vmatprep.subr.mxu0 0.0
  %2016 = vmatpush2.msra.mxu0 0.0
  %2017 = vmatprep.subr.mxu0 0.0
  %2018 = vmatpush2.msra.mxu0 0.0
  %2019 = vmatprep.subr.mxu0 0.0
  %2020 = vmatpush2.msra.mxu0 0.0
  %2021 = vmatprep.subr.mxu0 0.0
  %2022 = vmatpush2.msra.mxu0 0.0
  %2023 = vmatprep.subr.mxu0 0.0
  %2024 = vmatpush2.msra.mxu0 0.0
  %2025 = vmatprep.subr.mxu0 0.0
  %2026 = vmatpush2.msra.mxu0 0.0
  %2027 = vmatprep.subr.mxu0 0.0
  %2028 = vmatpush2.msra.mxu0 0.0
  %2029 = vmatprep.subr.mxu0 0.0
  %2030 = vmatpush2.msra.mxu0 0.0
  %2031 = vmatprep.subr.mxu0 0.0
  %2032 = vmatpush2.msra.mxu0 0.0
  %2033 = vmatprep.subr.mxu0 0.0
  %2034 = vmatpush2.msra.mxu0 0.0
  %2035 = vmatprep.subr.mxu0 0.0
  %2036 = vmatpush2.msra.mxu0 0.0
  %2037 = vmatprep.mubr.f32.mxu0 0.0
  %2038 = vmatmul.mubr.f32.gmra.mxu0 %v1971
  %v2039 = vpop.f32.mrf.mxu0
  %v2040 = vadd.f32 0.0, %v2039
  %v2041 = vpop.f32.mrf.mxu0
  %2042 = vdwg.mxu0
  %v2043 = vadd.f32 %v1235, %v2040
  %v2044 = vlaneseq
  %v2045 = vshrl.u32 %v2044, 7
  %v2046 = vsub.s32 7, %v2045
  %v2047 = vrot.slane %v105, %v2046
  %v2048 = vadd.f32 %v2043, %v2047
  %v2049 = vmul.f32 %v2048, %v205
  %v2051 = vsel %vm208, %v2049, 0
  %2053 = vmatprep.subr.mxu0 0.0
  %2054 = vmatpush1.msra.mxu0 0.0
  %2055 = vmatprep.subr.mxu0 0.0
  %2056 = vmatpush1.msra.mxu0 0.0
  %2057 = vmatprep.subr.mxu0 0.0
  %2058 = vmatpush1.msra.mxu0 0.0
  %2059 = vmatprep.subr.mxu0 0.0
  %2060 = vmatpush1.msra.mxu0 0.0
  %2061 = vmatprep.subr.mxu0 0.0
  %2062 = vmatpush1.msra.mxu0 0.0
  %2063 = vmatprep.subr.mxu0 0.0
  %2064 = vmatpush1.msra.mxu0 0.0
  %2065 = vmatprep.subr.mxu0 0.0
  %2066 = vmatpush1.msra.mxu0 0.0
  %2067 = vmatprep.subr.mxu0 0.0
  %2068 = vmatpush1.msra.mxu0 0.0
  %2069 = vmatprep.subr.mxu0 0.0
  %2070 = vmatpush1.msra.mxu0 0.0
  %2071 = vmatprep.subr.mxu0 0.0
  %2072 = vmatpush1.msra.mxu0 0.0
  %2073 = vmatprep.subr.mxu0 0.0
  %2074 = vmatpush1.msra.mxu0 0.0
  %2075 = vmatprep.subr.mxu0 0.0
  %2076 = vmatpush1.msra.mxu0 0.0
  %2077 = vmatprep.subr.mxu0 0.0
  %2078 = vmatpush1.msra.mxu0 %v99
  %2079 = vmatprep.subr.mxu0 0.0
  %2080 = vmatpush1.msra.mxu0 %v98
  %2081 = vmatprep.subr.mxu0 0.0
  %2082 = vmatpush1.msra.mxu0 %v97
  %2083 = vmatprep.subr.mxu0 0.0
  %2084 = vmatpush1.msra.mxu0 %v96
  %2085 = vmatprep.subr.mxu0 0.0
  %2086 = vmatpush2.msra.mxu0 0.0
  %2087 = vmatprep.subr.mxu0 0.0
  %2088 = vmatpush2.msra.mxu0 0.0
  %2089 = vmatprep.subr.mxu0 0.0
  %2090 = vmatpush2.msra.mxu0 0.0
  %2091 = vmatprep.subr.mxu0 0.0
  %2092 = vmatpush2.msra.mxu0 0.0
  %2093 = vmatprep.subr.mxu0 0.0
  %2094 = vmatpush2.msra.mxu0 0.0
  %2095 = vmatprep.subr.mxu0 0.0
  %2096 = vmatpush2.msra.mxu0 0.0
  %2097 = vmatprep.subr.mxu0 0.0
  %2098 = vmatpush2.msra.mxu0 0.0
  %2099 = vmatprep.subr.mxu0 0.0
  %2100 = vmatpush2.msra.mxu0 0.0
  %2101 = vmatprep.subr.mxu0 0.0
  %2102 = vmatpush2.msra.mxu0 0.0
  %2103 = vmatprep.subr.mxu0 0.0
  %2104 = vmatpush2.msra.mxu0 0.0
  %2105 = vmatprep.subr.mxu0 0.0
  %2106 = vmatpush2.msra.mxu0 0.0
  %2107 = vmatprep.subr.mxu0 0.0
  %2108 = vmatpush2.msra.mxu0 0.0
  %2109 = vmatprep.subr.mxu0 0.0
  %2110 = vmatpush2.msra.mxu0 0.0
  %2111 = vmatprep.subr.mxu0 0.0
  %2112 = vmatpush2.msra.mxu0 0.0
  %2113 = vmatprep.subr.mxu0 0.0
  %2114 = vmatpush2.msra.mxu0 0.0
  %2115 = vmatprep.subr.mxu0 0.0
  %2116 = vmatpush2.msra.mxu0 0.0
  %2117 = vmatprep.mubr.f32.mxu0 0.0
  %2118 = vmatmul.mubr.f32.gmra.mxu0 %v2051
  %v2119 = vpop.f32.mrf.mxu0
  %v2120 = vadd.f32 0.0, %v2119
  %v2121 = vpop.f32.mrf.mxu0
  %2122 = vdwg.mxu0
  %2124 = vrot.lane.b32.xlu0 %v2120, 96
  %v2125 = vpop.permute.xlu0 %2124
  %v2127 = vlaneseq
  %v2128 = vshrl.u32 %v2127, 7
  %v2129 = vsub.s32 0, %v2128
  %v2130 = vrot.slane %v106, %v2129
  %v2131 = vmul.f32 %v456, %v2130
  %v2132 = vmul.f32 %v459, %v2130
  %v2133 = vmul.f32 %v462, %v2130
  %v2134 = vmul.f32 %v465, %v2130
  %v2135 = vmul.f32 %v468, %v2130
  %v2136 = vmul.f32 %v471, %v2130
  %v2137 = vmul.f32 %v474, %v2130
  %2138 = vmatprep.subr.mxu0 0.0
  %2139 = vmatpush1.msra.mxu0 0.0
  %2140 = vmatprep.subr.mxu0 0.0
  %2141 = vmatpush1.msra.mxu0 0.0
  %2142 = vmatprep.subr.mxu0 0.0
  %2143 = vmatpush1.msra.mxu0 0.0
  %2144 = vmatprep.subr.mxu0 0.0
  %2145 = vmatpush1.msra.mxu0 0.0
  %2146 = vmatprep.subr.mxu0 0.0
  %2147 = vmatpush1.msra.mxu0 0.0
  %2148 = vmatprep.subr.mxu0 0.0
  %2149 = vmatpush1.msra.mxu0 0.0
  %2150 = vmatprep.subr.mxu0 0.0
  %2151 = vmatpush1.msra.mxu0 0.0
  %2152 = vmatprep.subr.mxu0 0.0
  %2153 = vmatpush1.msra.mxu0 0.0
  %2154 = vmatprep.subr.mxu0 0.0
  %2155 = vmatpush1.msra.mxu0 0.0
  %2156 = vmatprep.subr.mxu0 0.0
  %2157 = vmatpush1.msra.mxu0 0.0
  %2158 = vmatprep.subr.mxu0 0.0
  %2159 = vmatpush1.msra.mxu0 0.0
  %2160 = vmatprep.subr.mxu0 0.0
  %2161 = vmatpush1.msra.mxu0 0.0
  %2162 = vmatprep.subr.mxu0 0.0
  %2163 = vmatpush1.msra.mxu0 0.0
  %2164 = vmatprep.subr.mxu0 0.0
  %2165 = vmatpush1.msra.mxu0 0.0
  %2166 = vmatprep.subr.mxu0 0.0
  %2167 = vmatpush1.msra.mxu0 %v2125
  %2168 = vmatprep.subr.mxu0 0.0
  %2169 = vmatpush1.msra.mxu0 %v2120
  %2170 = vmatprep.subr.mxu0 0.0
  %2171 = vmatpush2.msra.mxu0 0.0
  %2172 = vmatprep.subr.mxu0 0.0
  %2173 = vmatpush2.msra.mxu0 0.0
  %2174 = vmatprep.subr.mxu0 0.0
  %2175 = vmatpush2.msra.mxu0 0.0
  %2176 = vmatprep.subr.mxu0 0.0
  %2177 = vmatpush2.msra.mxu0 0.0
  %2178 = vmatprep.subr.mxu0 0.0
  %2179 = vmatpush2.msra.mxu0 0.0
  %2180 = vmatprep.subr.mxu0 0.0
  %2181 = vmatpush2.msra.mxu0 0.0
  %2182 = vmatprep.subr.mxu0 0.0
  %2183 = vmatpush2.msra.mxu0 0.0
  %2184 = vmatprep.subr.mxu0 0.0
  %2185 = vmatpush2.msra.mxu0 0.0
  %2186 = vmatprep.subr.mxu0 0.0
  %2187 = vmatpush2.msra.mxu0 0.0
  %2188 = vmatprep.subr.mxu0 0.0
  %2189 = vmatpush2.msra.mxu0 0.0
  %2190 = vmatprep.subr.mxu0 0.0
  %2191 = vmatpush2.msra.mxu0 0.0
  %2192 = vmatprep.subr.mxu0 0.0
  %2193 = vmatpush2.msra.mxu0 0.0
  %2194 = vmatprep.subr.mxu0 0.0
  %2195 = vmatpush2.msra.mxu0 0.0
  %2196 = vmatprep.subr.mxu0 0.0
  %2197 = vmatpush2.msra.mxu0 0.0
  %2198 = vmatprep.subr.mxu0 0.0
  %2199 = vmatpush2.msra.mxu0 0.0
  %2200 = vmatprep.subr.mxu0 0.0
  %2201 = vmatpush2.msra.mxu0 0.0
  %2202 = vmatprep.mubr.f32.mxu0 0.0
  %2203 = vmatmul.mubr.f32.gmra.mxu0 %v298
  %v2204 = vpop.f32.mrf.mxu0
  %v2205 = vadd.f32 %v2131, %v2204
  %v2206 = vpop.f32.mrf.mxu0
  %2207 = vmatprep.mubr.f32.mxu0 0.0
  %2208 = vmatmul.mubr.f32.gmra.mxu0 %v301
  %v2209 = vpop.f32.mrf.mxu0
  %v2210 = vadd.f32 %v2132, %v2209
  %v2211 = vpop.f32.mrf.mxu0
  %2212 = vmatprep.mubr.f32.mxu0 0.0
  %2213 = vmatmul.mubr.f32.gmra.mxu0 %v304
  %v2214 = vpop.f32.mrf.mxu0
  %v2215 = vadd.f32 %v2133, %v2214
  %v2216 = vpop.f32.mrf.mxu0
  %2217 = vmatprep.mubr.f32.mxu0 0.0
  %2218 = vmatmul.mubr.f32.gmra.mxu0 %v307
  %v2219 = vpop.f32.mrf.mxu0
  %v2220 = vadd.f32 %v2134, %v2219
  %v2221 = vpop.f32.mrf.mxu0
  %2222 = vmatprep.mubr.f32.mxu0 0.0
  %2223 = vmatmul.mubr.f32.gmra.mxu0 %v310
  %v2224 = vpop.f32.mrf.mxu0
  %v2225 = vadd.f32 %v2135, %v2224
  %v2226 = vpop.f32.mrf.mxu0
  %2227 = vmatprep.mubr.f32.mxu0 0.0
  %2228 = vmatmul.mubr.f32.gmra.mxu0 %v313
  %v2229 = vpop.f32.mrf.mxu0
  %v2230 = vadd.f32 %v2136, %v2229
  %v2231 = vpop.f32.mrf.mxu0
  %2232 = vmatprep.mubr.f32.mxu0 0.0
  %2233 = vmatmul.mubr.f32.gmra.mxu0 %v316
  %v2234 = vpop.f32.mrf.mxu0
  %v2235 = vadd.f32 %v2137, %v2234
  %v2236 = vpop.f32.mrf.mxu0
  %2237 = vdwg.mxu0
  %v2238 = vlaneseq
  %v2239 = vshrl.u32 %v2238, 7
  %v2240 = vsub.s32 1, %v2239
  %v2241 = vrot.slane %v106, %v2240
  %v2242 = vmul.f32 %v573, %v2241
  %v2243 = vmul.f32 %v578, %v2241
  %v2244 = vmul.f32 %v583, %v2241
  %v2245 = vmul.f32 %v588, %v2241
  %v2246 = vmul.f32 %v593, %v2241
  %v2247 = vmul.f32 %v598, %v2241
  %v2248 = vmul.f32 %v603, %v2241
  %v2249 = vadd.f32 %v2205, %v2242
  %v2250 = vadd.f32 %v2210, %v2243
  %v2251 = vadd.f32 %v2215, %v2244
  %v2252 = vadd.f32 %v2220, %v2245
  %v2253 = vadd.f32 %v2225, %v2246
  %v2254 = vadd.f32 %v2230, %v2247
  %v2255 = vadd.f32 %v2235, %v2248
  %v2256 = vlaneseq
  %v2257 = vshrl.u32 %v2256, 7
  %v2258 = vsub.s32 2, %v2257
  %v2259 = vrot.slane %v106, %v2258
  %v2260 = vadd.f32 %v2249, %v2259
  %v2261 = vadd.f32 %v2250, %v2259
  %v2262 = vadd.f32 %v2251, %v2259
  %v2263 = vadd.f32 %v2252, %v2259
  %v2264 = vadd.f32 %v2253, %v2259
  %v2265 = vadd.f32 %v2254, %v2259
  %v2266 = vadd.f32 %v2255, %v2259
  %v2267 = vxor.u32 %v2260, 2147483648
  %v2268 = vxor.u32 %v2261, 2147483648
  %v2269 = vxor.u32 %v2262, 2147483648
  %v2270 = vxor.u32 %v2263, 2147483648
  %v2271 = vxor.u32 %v2264, 2147483648
  %v2272 = vxor.u32 %v2265, 2147483648
  %v2273 = vxor.u32 %v2266, 2147483648
  %v2274 = vmul.f32 %v2267, 1.442695
  %v2275 = vpow.pop %v2274
  %v2276 = vmul.f32 %v2268, 1.442695
  %v2277 = vpow.pop %v2276
  %v2278 = vmul.f32 %v2269, 1.442695
  %v2279 = vpow.pop %v2278
  %v2280 = vmul.f32 %v2270, 1.442695
  %v2281 = vpow.pop %v2280
  %v2282 = vmul.f32 %v2271, 1.442695
  %v2283 = vpow.pop %v2282
  %v2284 = vmul.f32 %v2272, 1.442695
  %v2285 = vpow.pop %v2284
  %v2286 = vmul.f32 %v2273, 1.442695
  %v2287 = vpow.pop %v2286
  %v2288 = vadd.f32 %v2275, 1.0
  %v2289 = vadd.f32 %v2277, 1.0
  %v2290 = vadd.f32 %v2279, 1.0
  %v2291 = vadd.f32 %v2281, 1.0
  %v2292 = vadd.f32 %v2283, 1.0
  %v2293 = vadd.f32 %v2285, 1.0
  %v2294 = vadd.f32 %v2287, 1.0
  %v2295 = vrcp.pop %v2288
  %v2296 = vmul.f32 1.0, %v2295
  %v2297 = vrcp.pop %v2289
  %v2298 = vmul.f32 1.0, %v2297
  %v2299 = vrcp.pop %v2290
  %v2300 = vmul.f32 1.0, %v2299
  %v2301 = vrcp.pop %v2291
  %v2302 = vmul.f32 1.0, %v2301
  %v2303 = vrcp.pop %v2292
  %v2304 = vmul.f32 1.0, %v2303
  %v2305 = vrcp.pop %v2293
  %v2306 = vmul.f32 1.0, %v2305
  %v2307 = vrcp.pop %v2294
  %v2308 = vmul.f32 1.0, %v2307
  %v2309 = vmul.f32 %v2260, %v2296
  %v2310 = vmul.f32 %v2261, %v2298
  %v2311 = vmul.f32 %v2262, %v2300
  %v2312 = vmul.f32 %v2263, %v2302
  %v2313 = vmul.f32 %v2264, %v2304
  %v2314 = vmul.f32 %v2265, %v2306
  %v2315 = vmul.f32 %v2266, %v2308
  %v2316 = vlaneseq
  %v2317 = vshrl.u32 %v2316, 7
  %v2318 = vsub.s32 3, %v2317
  %v2319 = vrot.slane %v106, %v2318
  %v2321 = vsel %vm208, %v2309, 0
  %v2324 = vsel %vm208, %v2310, 0
  %v2327 = vsel %vm208, %v2311, 0
  %v2330 = vsel %vm208, %v2312, 0
  %v2333 = vsel %vm208, %v2313, 0
  %v2336 = vsel %vm208, %v2314, 0
  %v2339 = vsel %vm208, %v2315, 0
  %2341 = vmatprep.subr.mxu0 0.0
  %2342 = vmatpush1.msra.mxu0 0.0
  %2343 = vmatprep.subr.mxu0 0.0
  %2344 = vmatpush1.msra.mxu0 0.0
  %2345 = vmatprep.subr.mxu0 0.0
  %2346 = vmatpush1.msra.mxu0 0.0
  %2347 = vmatprep.subr.mxu0 0.0
  %2348 = vmatpush1.msra.mxu0 0.0
  %2349 = vmatprep.subr.mxu0 0.0
  %2350 = vmatpush1.msra.mxu0 0.0
  %2351 = vmatprep.subr.mxu0 0.0
  %2352 = vmatpush1.msra.mxu0 0.0
  %2353 = vmatprep.subr.mxu0 0.0
  %2354 = vmatpush1.msra.mxu0 0.0
  %2355 = vmatprep.subr.mxu0 0.0
  %2356 = vmatpush1.msra.mxu0 0.0
  %2357 = vmatprep.subr.mxu0 0.0
  %2358 = vmatpush1.msra.mxu0 0.0
  %2359 = vmatprep.subr.mxu0 0.0
  %2360 = vmatpush1.msra.mxu0 0.0
  %2361 = vmatprep.subr.mxu0 0.0
  %2362 = vmatpush1.msra.mxu0 0.0
  %2363 = vmatprep.subr.mxu0 0.0
  %2364 = vmatpush1.msra.mxu0 0.0
  %2365 = vmatprep.subr.mxu0 0.0
  %2366 = vmatpush1.msra.mxu0 %v103
  %2367 = vmatprep.subr.mxu0 0.0
  %2368 = vmatpush1.msra.mxu0 %v102
  %2369 = vmatprep.subr.mxu0 0.0
  %2370 = vmatpush1.msra.mxu0 %v101
  %2371 = vmatprep.subr.mxu0 0.0
  %2372 = vmatpush1.msra.mxu0 %v100
  %2373 = vmatprep.subr.mxu0 0.0
  %2374 = vmatpush2.msra.mxu0 0.0
  %2375 = vmatprep.subr.mxu0 0.0
  %2376 = vmatpush2.msra.mxu0 0.0
  %2377 = vmatprep.subr.mxu0 0.0
  %2378 = vmatpush2.msra.mxu0 0.0
  %2379 = vmatprep.subr.mxu0 0.0
  %2380 = vmatpush2.msra.mxu0 0.0
  %2381 = vmatprep.subr.mxu0 0.0
  %2382 = vmatpush2.msra.mxu0 0.0
  %2383 = vmatprep.subr.mxu0 0.0
  %2384 = vmatpush2.msra.mxu0 0.0
  %2385 = vmatprep.subr.mxu0 0.0
  %2386 = vmatpush2.msra.mxu0 0.0
  %2387 = vmatprep.subr.mxu0 0.0
  %2388 = vmatpush2.msra.mxu0 0.0
  %2389 = vmatprep.subr.mxu0 0.0
  %2390 = vmatpush2.msra.mxu0 0.0
  %2391 = vmatprep.subr.mxu0 0.0
  %2392 = vmatpush2.msra.mxu0 0.0
  %2393 = vmatprep.subr.mxu0 0.0
  %2394 = vmatpush2.msra.mxu0 0.0
  %2395 = vmatprep.subr.mxu0 0.0
  %2396 = vmatpush2.msra.mxu0 0.0
  %2397 = vmatprep.subr.mxu0 0.0
  %2398 = vmatpush2.msra.mxu0 0.0
  %2399 = vmatprep.subr.mxu0 0.0
  %2400 = vmatpush2.msra.mxu0 0.0
  %2401 = vmatprep.subr.mxu0 0.0
  %2402 = vmatpush2.msra.mxu0 0.0
  %2403 = vmatprep.subr.mxu0 0.0
  %2404 = vmatpush2.msra.mxu0 0.0
  %2405 = vmatprep.mubr.f32.mxu0 0.0
  %2406 = vmatmul.mubr.f32.gmra.mxu0 %v2321
  %v2407 = vpop.f32.mrf.mxu0
  %v2408 = vadd.f32 %v2319, %v2407
  %v2409 = vpop.f32.mrf.mxu0
  %2410 = vmatprep.mubr.f32.mxu0 0.0
  %2411 = vmatmul.mubr.f32.gmra.mxu0 %v2324
  %v2412 = vpop.f32.mrf.mxu0
  %v2413 = vadd.f32 %v2319, %v2412
  %v2414 = vpop.f32.mrf.mxu0
  %2415 = vmatprep.mubr.f32.mxu0 0.0
  %2416 = vmatmul.mubr.f32.gmra.mxu0 %v2327
  %v2417 = vpop.f32.mrf.mxu0
  %v2418 = vadd.f32 %v2319, %v2417
  %v2419 = vpop.f32.mrf.mxu0
  %2420 = vmatprep.mubr.f32.mxu0 0.0
  %2421 = vmatmul.mubr.f32.gmra.mxu0 %v2330
  %v2422 = vpop.f32.mrf.mxu0
  %v2423 = vadd.f32 %v2319, %v2422
  %v2424 = vpop.f32.mrf.mxu0
  %2425 = vmatprep.mubr.f32.mxu0 0.0
  %2426 = vmatmul.mubr.f32.gmra.mxu0 %v2333
  %v2427 = vpop.f32.mrf.mxu0
  %v2428 = vadd.f32 %v2319, %v2427
  %v2429 = vpop.f32.mrf.mxu0
  %2430 = vmatprep.mubr.f32.mxu0 0.0
  %2431 = vmatmul.mubr.f32.gmra.mxu0 %v2336
  %v2432 = vpop.f32.mrf.mxu0
  %v2433 = vadd.f32 %v2319, %v2432
  %v2434 = vpop.f32.mrf.mxu0
  %2435 = vmatprep.mubr.f32.mxu0 0.0
  %2436 = vmatmul.mubr.f32.gmra.mxu0 %v2339
  %v2437 = vpop.f32.mrf.mxu0
  %v2438 = vadd.f32 %v2319, %v2437
  %v2439 = vpop.f32.mrf.mxu0
  %2440 = vdwg.mxu0
  %v2441 = vxor.u32 %v2408, 2147483648
  %v2442 = vxor.u32 %v2413, 2147483648
  %v2443 = vxor.u32 %v2418, 2147483648
  %v2444 = vxor.u32 %v2423, 2147483648
  %v2445 = vxor.u32 %v2428, 2147483648
  %v2446 = vxor.u32 %v2433, 2147483648
  %v2447 = vxor.u32 %v2438, 2147483648
  %v2448 = vmul.f32 %v2441, 1.442695
  %v2449 = vpow.pop %v2448
  %v2450 = vmul.f32 %v2442, 1.442695
  %v2451 = vpow.pop %v2450
  %v2452 = vmul.f32 %v2443, 1.442695
  %v2453 = vpow.pop %v2452
  %v2454 = vmul.f32 %v2444, 1.442695
  %v2455 = vpow.pop %v2454
  %v2456 = vmul.f32 %v2445, 1.442695
  %v2457 = vpow.pop %v2456
  %v2458 = vmul.f32 %v2446, 1.442695
  %v2459 = vpow.pop %v2458
  %v2460 = vmul.f32 %v2447, 1.442695
  %v2461 = vpow.pop %v2460
  %v2462 = vadd.f32 %v2449, 1.0
  %v2463 = vadd.f32 %v2451, 1.0
  %v2464 = vadd.f32 %v2453, 1.0
  %v2465 = vadd.f32 %v2455, 1.0
  %v2466 = vadd.f32 %v2457, 1.0
  %v2467 = vadd.f32 %v2459, 1.0
  %v2468 = vadd.f32 %v2461, 1.0
  %v2469 = vrcp.pop %v2462
  %v2470 = vmul.f32 1.0, %v2469
  %v2471 = vrcp.pop %v2463
  %v2472 = vmul.f32 1.0, %v2471
  %v2473 = vrcp.pop %v2464
  %v2474 = vmul.f32 1.0, %v2473
  %v2475 = vrcp.pop %v2465
  %v2476 = vmul.f32 1.0, %v2475
  %v2477 = vrcp.pop %v2466
  %v2478 = vmul.f32 1.0, %v2477
  %v2479 = vrcp.pop %v2467
  %v2480 = vmul.f32 1.0, %v2479
  %v2481 = vrcp.pop %v2468
  %v2482 = vmul.f32 1.0, %v2481
  %v2483 = vmul.f32 %v2408, %v2470
  %v2484 = vmul.f32 %v2413, %v2472
  %v2485 = vmul.f32 %v2418, %v2474
  %v2486 = vmul.f32 %v2423, %v2476
  %v2487 = vmul.f32 %v2428, %v2478
  %v2488 = vmul.f32 %v2433, %v2480
  %v2489 = vmul.f32 %v2438, %v2482
  %v2490 = vlaneseq
  %v2491 = vshrl.u32 %v2490, 7
  %v2492 = vsub.s32 4, %v2491
  %v2493 = vrot.slane %v106, %v2492
  %v2494 = vmul.f32 %v2483, %v2493
  %v2495 = vmul.f32 %v2484, %v2493
  %v2496 = vmul.f32 %v2485, %v2493
  %v2497 = vmul.f32 %v2486, %v2493
  %v2498 = vmul.f32 %v2487, %v2493
  %v2499 = vmul.f32 %v2488, %v2493
  %v2500 = vmul.f32 %v2489, %v2493
  %v2501 = vsel %vm208, %v2494, 0.0
  %2502 = vadd.xlane.f32.xlu0 %v2501
  %v2503 = vpop.xlane.xlu0 %2502
  %v2504 = vsel %vm208, %v2495, 0.0
  %2505 = vadd.xlane.f32.xlu0 %v2504
  %v2506 = vpop.xlane.xlu0 %2505
  %v2507 = vsel %vm208, %v2496, 0.0
  %2508 = vadd.xlane.f32.xlu0 %v2507
  %v2509 = vpop.xlane.xlu0 %2508
  %v2510 = vsel %vm208, %v2497, 0.0
  %2511 = vadd.xlane.f32.xlu0 %v2510
  %v2512 = vpop.xlane.xlu0 %2511
  %v2513 = vsel %vm208, %v2498, 0.0
  %2514 = vadd.xlane.f32.xlu0 %v2513
  %v2515 = vpop.xlane.xlu0 %2514
  %v2516 = vsel %vm208, %v2499, 0.0
  %2517 = vadd.xlane.f32.xlu0 %v2516
  %v2518 = vpop.xlane.xlu0 %2517
  %v2519 = vsel %vm208, %v2500, 0.0
  %2520 = vadd.xlane.f32.xlu0 %v2519
  %v2521 = vpop.xlane.xlu0 %2520
  %v2522 = vmul.f32 %v2503, %v49
  %v2523 = vmul.f32 %v2506, %v50
  %v2524 = vmul.f32 %v2509, %v51
  %v2525 = vmul.f32 %v2512, %v52
  %v2526 = vmul.f32 %v2515, %v53
  %v2527 = vmul.f32 %v2518, %v54
  %v2528 = vmul.f32 %v2521, %v55
  %2530 = vset.pattern.permute.xlu0 0
  %2531 = vperm.xlu0 %2530, %v2522
  %v2532 = vpop.permute.xlu0 %2531
  %2535 = vset.pattern.permute.xlu0 0
  %2536 = vperm.xlu0 %2535, %v2523
  %v2537 = vpop.permute.xlu0 %2536
  %2540 = vset.pattern.permute.xlu0 0
  %2541 = vperm.xlu0 %2540, %v2524
  %v2542 = vpop.permute.xlu0 %2541
  %2545 = vset.pattern.permute.xlu0 0
  %2546 = vperm.xlu0 %2545, %v2525
  %v2547 = vpop.permute.xlu0 %2546
  %2550 = vset.pattern.permute.xlu0 0
  %2551 = vperm.xlu0 %2550, %v2526
  %v2552 = vpop.permute.xlu0 %2551
  %2555 = vset.pattern.permute.xlu0 0
  %2556 = vperm.xlu0 %2555, %v2527
  %v2557 = vpop.permute.xlu0 %2556
  %2560 = vset.pattern.permute.xlu0 0
  %2561 = vperm.xlu0 %2560, %v2528
  %v2562 = vpop.permute.xlu0 %2561
  %v2564 = vmul.f32 %v539, %v2532
  %v2565 = vmul.f32 %v541, %v2537
  %v2566 = vmul.f32 %v543, %v2542
  %v2567 = vmul.f32 %v545, %v2547
  %v2568 = vmul.f32 %v547, %v2552
  %v2569 = vmul.f32 %v549, %v2557
  %v2570 = vmul.f32 %v551, %v2562
  %2578 = vrot.lane.b32.xlu0 %v2564, 96
  %v2579 = vpop.permute.xlu0 %2578
  %2580 = vrot.lane.b32.xlu0 %v2565, 96
  %v2581 = vpop.permute.xlu0 %2580
  %2582 = vrot.lane.b32.xlu0 %v2566, 96
  %v2583 = vpop.permute.xlu0 %2582
  %2584 = vrot.lane.b32.xlu0 %v2567, 96
  %v2585 = vpop.permute.xlu0 %2584
  %2586 = vrot.lane.b32.xlu0 %v2568, 96
  %v2587 = vpop.permute.xlu0 %2586
  %2588 = vrot.lane.b32.xlu0 %v2569, 96
  %v2589 = vpop.permute.xlu0 %2588
  %2590 = vrot.lane.b32.xlu0 %v2570, 96
  %v2591 = vpop.permute.xlu0 %2590
  %2599 = vmatprep.subr.mxu0 0.0
  %2600 = vmatpush1.msra.mxu0 0.0
  %2601 = vmatprep.subr.mxu0 0.0
  %2602 = vmatpush1.msra.mxu0 0.0
  %2603 = vmatprep.subr.mxu0 0.0
  %2604 = vmatpush1.msra.mxu0 0.0
  %2605 = vmatprep.subr.mxu0 0.0
  %2606 = vmatpush1.msra.mxu0 0.0
  %2607 = vmatprep.subr.mxu0 0.0
  %2608 = vmatpush1.msra.mxu0 0.0
  %2609 = vmatprep.subr.mxu0 0.0
  %2610 = vmatpush1.msra.mxu0 0.0
  %2611 = vmatprep.subr.mxu0 0.0
  %2612 = vmatpush1.msra.mxu0 0.0
  %2613 = vmatprep.subr.mxu0 0.0
  %2614 = vmatpush1.msra.mxu0 0.0
  %2615 = vmatprep.subr.mxu0 0.0
  %2616 = vmatpush1.msra.mxu0 0.0
  %2617 = vmatprep.subr.mxu0 0.0
  %2618 = vmatpush1.msra.mxu0 %v2591
  %2619 = vmatprep.subr.mxu0 0.0
  %2620 = vmatpush1.msra.mxu0 %v2589
  %2621 = vmatprep.subr.mxu0 0.0
  %2622 = vmatpush1.msra.mxu0 %v2587
  %2623 = vmatprep.subr.mxu0 0.0
  %2624 = vmatpush1.msra.mxu0 %v2585
  %2625 = vmatprep.subr.mxu0 0.0
  %2626 = vmatpush1.msra.mxu0 %v2583
  %2627 = vmatprep.subr.mxu0 0.0
  %2628 = vmatpush1.msra.mxu0 %v2581
  %2629 = vmatprep.subr.mxu0 0.0
  %2630 = vmatpush1.msra.mxu0 %v2579
  %2631 = vmatprep.subr.mxu0 0.0
  %2632 = vmatpush2.msra.mxu0 0.0
  %2633 = vmatprep.subr.mxu0 0.0
  %2634 = vmatpush2.msra.mxu0 0.0
  %2635 = vmatprep.subr.mxu0 0.0
  %2636 = vmatpush2.msra.mxu0 0.0
  %2637 = vmatprep.subr.mxu0 0.0
  %2638 = vmatpush2.msra.mxu0 0.0
  %2639 = vmatprep.subr.mxu0 0.0
  %2640 = vmatpush2.msra.mxu0 0.0
  %2641 = vmatprep.subr.mxu0 0.0
  %2642 = vmatpush2.msra.mxu0 0.0
  %2643 = vmatprep.subr.mxu0 0.0
  %2644 = vmatpush2.msra.mxu0 0.0
  %2645 = vmatprep.subr.mxu0 0.0
  %2646 = vmatpush2.msra.mxu0 0.0
  %2647 = vmatprep.subr.mxu0 0.0
  %2648 = vmatpush2.msra.mxu0 0.0
  %2649 = vmatprep.subr.mxu0 0.0
  %2650 = vmatpush2.msra.mxu0 0.0
  %2651 = vmatprep.subr.mxu0 0.0
  %2652 = vmatpush2.msra.mxu0 0.0
  %2653 = vmatprep.subr.mxu0 0.0
  %2654 = vmatpush2.msra.mxu0 0.0
  %2655 = vmatprep.subr.mxu0 0.0
  %2656 = vmatpush2.msra.mxu0 0.0
  %2657 = vmatprep.subr.mxu0 0.0
  %2658 = vmatpush2.msra.mxu0 0.0
  %2659 = vmatprep.subr.mxu0 0.0
  %2660 = vmatpush2.msra.mxu0 0.0
  %2661 = vmatprep.subr.mxu0 0.0
  %2662 = vmatpush2.msra.mxu0 0.0
  %2663 = vmatprep.mubr.f32.mxu0 0.0
  %2664 = vmatmul.mubr.f32.gmra.mxu0 %v993
  %v2665 = vpop.f32.mrf.mxu0
  %v2666 = vadd.f32 0.0, %v2665
  %v2667 = vpop.f32.mrf.mxu0
  %2668 = vdwg.mxu0
  %v2669 = vmul.f32 %v2666, 0.01
  %v2670 = vadd.f32 %v32, %v2669
  %v2671 = vmul.f32 %v2670, %v205
  %v2672 = vmul.f32 %v2049, %v205
  %2673 = vst.msk [vmem:[%s8] sm:$0xff] %vm208, %v2672
  %2674 = vst.msk [vmem:[%s9] sm:$0xff] %vm453, %v2671
  // Predicated region
  $region34: #{equivariant_block.1} parent=0 // pred_check
    _
  $region35: #{equivariant_block.1} parent=0 // pred_check_branch
    %2676 = sbr.rel (0) target = $region37
  $region36: #{equivariant_block.1} parent=0 // pred_region
    _
  $region37: #{equivariant_block.1} parent=0 // pred_fallthru
    _
  // Predicated region
  $region38: #{equivariant_block.1} parent=0 // pred_check
    _
  $region39: #{equivariant_block.1} parent=0 // pred_check_branch
    %2678 = sbr.rel (0) target = $region41
  $region40: #{equivariant_block.1} parent=0 // pred_region
    _
  $region41: #{equivariant_block.1} parent=0 // pred_fallthru
    _
  // Predicated region
  $region42: #{equivariant_block.1} parent=0 // pred_check
    _
  $region43: #{equivariant_block.1} parent=0 // pred_check_branch
    %2680 = sbr.rel (0) target = $region45
  $region44: #{equivariant_block.1} parent=0 // pred_region
    _
  $region45: #{equivariant_block.1} parent=0 // pred_fallthru
    _
  // Predicated region
  $region46: #{equivariant_block.1} parent=0 // pred_check
    _
  $region47: #{equivariant_block.1} parent=0 // pred_check_branch
    %2682 = sbr.rel (0) target = $region49
  $region48: #{equivariant_block.1} parent=0 // pred_region
    _
  $region49: #{equivariant_block.1} parent=0 // pred_fallthru
    _

</llo_original>
